<compile_context>
chip_gen: v6e
topology: v6e:2x2x1
jax: 0.10.0
libtpu: 0.0.40
codegen_flags: <defaults>
</compile_context>

<pallas_src>
import functools

import numpy as np
import jax
import jax.numpy as jnp
from jax.experimental import pallas as pl
from jax.experimental.pallas import tpu as pltpu

NUM_FREQS = 4
D_RAW = 3
D_ENC = D_RAW + D_RAW * 2 * NUM_FREQS   # 27
D_IN = 32                               # padded encoding width (MXU friendly)
HIDDEN = 64
D_OUT = 4                               # [density, r, g, b]
D_OUT_PAD = 8                           # sublane-padded output rows
TILE_N_MAX = 4096                       # samples (lanes) per grid step


def _round_up(x, m):
    return ((x + m - 1) // m) * m


def _encoding_scale():
    """(D_IN, 3) projection matrix: row d holds the per-coordinate scale that
    produces encoded feature d (identity rows, then freq-scaled sin/cos rows,
    matching concat([xyz, sin(xyz*freqs), cos(xyz*freqs)], pad-to-32))."""
    s = np.zeros((D_IN, D_RAW), np.float32)
    freqs = (2.0 ** np.arange(NUM_FREQS, dtype=np.float32)) * np.pi
    for c in range(D_RAW):
        s[c, c] = 1.0
        for l in range(NUM_FREQS):
            s[D_RAW + c * NUM_FREQS + l, c] = freqs[l]                      # sin rows
            s[D_RAW + D_RAW * NUM_FREQS + c * NUM_FREQS + l, c] = freqs[l]  # cos rows
    return s


def _field_kernel(pos_ref, scale_ref, w1_ref, b1_ref, w2_ref, b2_ref,
                  wo_ref, bo_ref, out_ref):
    """One tile, transposed layout: features on sublanes, samples on lanes.

    pos_ref:   (3, TILE_N)         f32   raw xyz
    scale_ref: (D_IN, 3)           f32   encoding projection
    w1_ref:    (HIDDEN, D_IN)      f32
    b1_ref:    (HIDDEN, 1)         f32
    w2_ref:    (HIDDEN, HIDDEN)    f32
    b2_ref:    (HIDDEN, 1)         f32
    wo_ref:    (D_OUT_PAD, HIDDEN) f32   (rows 4..7 zero)
    bo_ref:    (D_OUT_PAD, 1)      f32
    out_ref:   (D_OUT_PAD, TILE_N) f32   row0 = softplus density, rows1..3 sigmoid rgb
    """
    pos = pos_ref[...]                                   # (3, tile_n)
    s = scale_ref[...]                                   # (D_IN, 3)

    # Fused frequency encoding in VMEM: proj[d, i] = scale[d, c(d)] * pos[c(d), i]
    proj = (s[:, 0:1] * pos[0:1, :]
            + s[:, 1:2] * pos[1:2, :]
            + s[:, 2:3] * pos[2:3, :])                   # (D_IN, tile_n) f32
    row = jax.lax.broadcasted_iota(jnp.int32, proj.shape, 0)
    enc = jnp.where(row < D_RAW, proj,
          jnp.where(row < D_RAW + D_RAW * NUM_FREQS, jnp.sin(proj),
          jnp.where(row < D_ENC, jnp.cos(proj), 0.0)))   # (D_IN, tile_n) f32

    # MLP: f32 MXU matmuls with f32 accumulation (portable; tiny FLOP count).
    h = jnp.dot(w1_ref[...], enc,
                preferred_element_type=jnp.float32) + b1_ref[...]
    h = jnp.maximum(h, 0.0)
    h = jnp.dot(w2_ref[...], h,
                preferred_element_type=jnp.float32) + b2_ref[...]
    h = jnp.maximum(h, 0.0)
    o = jnp.dot(wo_ref[...], h,
                preferred_element_type=jnp.float32) + bo_ref[...]   # (8, tile_n)

    orow = jax.lax.broadcasted_iota(jnp.int32, o.shape, 0)
    out_ref[...] = jnp.where(orow == 0, jax.nn.softplus(o),
                   jnp.where(orow < D_OUT, jax.nn.sigmoid(o), 0.0))


@functools.partial(jax.jit, static_argnames=("compute_normals",))
def neraf_vision_field_value(positions, params, compute_normals=False):
    """Forward pass of the (synthetic) vision field on flattened ray samples.

    positions: [N, 3] float32 sample locations.
    Returns a dict {"density": [N, 1], "rgb": [N, 3]}.
    """
    if compute_normals:
        # TODO(synk): analytic normals (autodiff through the field) not implemented.
        raise NotImplementedError("compute_normals=True is not supported")

    n = positions.shape[0]
    n_min = _round_up(max(n, 1), 128)
    tile_n = min(TILE_N_MAX, n_min)          # large tile; shrinks for tiny inputs
    n_pad = _round_up(n_min, tile_n)
    grid = (n_pad // tile_n,)

    # Lane-dense transposed input: only raw positions are padded/written (12 B/row).
    pos_t = jnp.pad(positions.astype(jnp.float32), ((0, n_pad - n), (0, 0))).T  # (3, n_pad)

    # Tiny weight prep (transpose/pad) — negligible vs. per-sample traffic.
    w1, b1, w2, b2, wo, bo = params
    scale = jnp.asarray(_encoding_scale())                                    # (D_IN, 3) f32
    w1_t = w1.T.astype(jnp.float32)                                           # (HIDDEN, D_IN)
    w2_t = w2.T.astype(jnp.float32)                                           # (HIDDEN, HIDDEN)
    wo_t = jnp.pad(wo.T, ((0, D_OUT_PAD - D_OUT), (0, 0))).astype(jnp.float32)
    b1_t = b1.reshape(HIDDEN, 1).astype(jnp.float32)
    b2_t = b2.reshape(HIDDEN, 1).astype(jnp.float32)
    bo_t = jnp.pad(bo.reshape(D_OUT, 1),
                   ((0, D_OUT_PAD - D_OUT), (0, 0))).astype(jnp.float32)

    out_t = pl.pallas_call(
        _field_kernel,
        out_shape=jax.ShapeDtypeStruct((D_OUT_PAD, n_pad), jnp.float32),
        grid_spec=pltpu.PrefetchScalarGridSpec(
            num_scalar_prefetch=0,
            grid=grid,
            in_specs=[
                pl.BlockSpec((D_RAW, tile_n), lambda i: (0, i)),        # positions
                pl.BlockSpec((D_IN, D_RAW), lambda i: (0, 0)),          # encoding scale
                pl.BlockSpec((HIDDEN, D_IN), lambda i: (0, 0)),         # w1^T
                pl.BlockSpec((HIDDEN, 1), lambda i: (0, 0)),            # b1
                pl.BlockSpec((HIDDEN, HIDDEN), lambda i: (0, 0)),       # w2^T
                pl.BlockSpec((HIDDEN, 1), lambda i: (0, 0)),            # b2
                pl.BlockSpec((D_OUT_PAD, HIDDEN), lambda i: (0, 0)),    # wo^T (padded)
                pl.BlockSpec((D_OUT_PAD, 1), lambda i: (0, 0)),         # bo (padded)
            ],
            out_specs=pl.BlockSpec((D_OUT_PAD, tile_n), lambda i: (0, i)),
        ),
        compiler_params=pltpu.CompilerParams(
            dimension_semantics=("parallel",)),
    )(pos_t, scale, w1_t, b1_t, w2_t, b2_t, wo_t, bo_t)

    density = out_t[0:1, :n].T                 # (N, 1)
    rgb = out_t[1:D_OUT, :n].T                 # (N, 3)
    return {"density": density, "rgb": rgb}


def init_params(key):
    """Deterministic parameter init (shapes implied by the field MLP)."""
    k1, k2, k3 = jax.random.split(key, 3)
    w1 = jax.random.normal(k1, (D_IN, HIDDEN), jnp.float32) * (1.0 / jnp.sqrt(D_IN))
    b1 = jnp.zeros((HIDDEN,), jnp.float32)
    w2 = jax.random.normal(k2, (HIDDEN, HIDDEN), jnp.float32) * (1.0 / jnp.sqrt(HIDDEN))
    b2 = jnp.zeros((HIDDEN,), jnp.float32)
    wo = jax.random.normal(k3, (HIDDEN, D_OUT), jnp.float32) * (1.0 / jnp.sqrt(HIDDEN))
    bo = jnp.zeros((D_OUT,), jnp.float32)
    return (w1, b1, w2, b2, wo, bo)


def _reference(positions, params):
    """Pure-JAX f32 reference mirroring the kernel math."""
    n = positions.shape[0]
    freqs = (2.0 ** jnp.arange(NUM_FREQS, dtype=jnp.float32)) * jnp.pi
    scaled = positions[:, :, None] * freqs[None, None, :]
    enc = jnp.concatenate(
        [positions, jnp.sin(scaled).reshape(n, -1), jnp.cos(scaled).reshape(n, -1)],
        axis=-1,
    )
    enc = jnp.pad(enc, ((0, 0), (0, D_IN - D_ENC)))
    w1, b1, w2, b2, wo, bo = params
    h = jnp.maximum(enc @ w1 + b1, 0.0)
    h = jnp.maximum(h @ w2 + b2, 0.0)
    o = h @ wo + bo
    return {"density": jax.nn.softplus(o[:, :1]), "rgb": jax.nn.sigmoid(o[:, 1:])}


if __name__ == "__main__":
    key = jax.random.PRNGKey(0)
    k_pos, k_par = jax.random.split(key)

    num_rays, samples_per_ray = 4, 32          # small ray-sample bundle
    positions = jax.random.uniform(
        k_pos, (num_rays, samples_per_ray, D_RAW), jnp.float32, minval=-1.0, maxval=1.0
    ).reshape(-1, D_RAW)                        # flatten ray samples -> [N, 3]

    params = init_params(k_par)

    out = neraf_vision_field_value(positions, params, compute_normals=False)
    out = jax.block_until_ready(out)

    assert out["density"].shape == (positions.shape[0], 1)
    assert out["rgb"].shape == (positions.shape[0], 3)

    ref = _reference(positions, params)
    assert jnp.allclose(out["density"], ref["density"], atol=1e-2, rtol=1e-2)
    assert jnp.allclose(out["rgb"], ref["rgb"], atol=1e-2, rtol=1e-2)

    print("KERNEL_OK")
</pallas_src>

<mosaic_0001>
module attributes {stable_mosaic.version = 11 : i64} {
  func.func @_field_kernel(%arg0: i32, %arg1: memref<3x128xf32, #tpu.memory_space<vmem>>, %arg2: memref<32x3xf32, #tpu.memory_space<vmem>>, %arg3: memref<64x32xf32, #tpu.memory_space<vmem>>, %arg4: memref<64x1xf32, #tpu.memory_space<vmem>>, %arg5: memref<64x64xf32, #tpu.memory_space<vmem>>, %arg6: memref<64x1xf32, #tpu.memory_space<vmem>>, %arg7: memref<8x64xf32, #tpu.memory_space<vmem>>, %arg8: memref<8x1xf32, #tpu.memory_space<vmem>>, %arg9: memref<8x128xf32, #tpu.memory_space<vmem>>) attributes {dimension_semantics = [#tpu.dimension_semantics<parallel>], iteration_bounds = array<i64: 1>, scalar_prefetch = 0 : i64, scratch_operands = 0 : i64, tpu.core_type = #tpu.core_type<tc>, window_params = [{transform_indices = @transform_0, window_bounds = array<i64: 3, 128>}, {pipeline_mode = #tpu.pipeline_mode<synchronous>, transform_indices = @transform_1, window_bounds = array<i64: 32, 3>}, {pipeline_mode = #tpu.pipeline_mode<synchronous>, transform_indices = @transform_2, window_bounds = array<i64: 64, 32>}, {pipeline_mode = #tpu.pipeline_mode<synchronous>, transform_indices = @transform_3, window_bounds = array<i64: 64, 1>}, {pipeline_mode = #tpu.pipeline_mode<synchronous>, transform_indices = @transform_4, window_bounds = array<i64: 64, 64>}, {pipeline_mode = #tpu.pipeline_mode<synchronous>, transform_indices = @transform_5, window_bounds = array<i64: 64, 1>}, {pipeline_mode = #tpu.pipeline_mode<synchronous>, transform_indices = @transform_6, window_bounds = array<i64: 8, 64>}, {pipeline_mode = #tpu.pipeline_mode<synchronous>, transform_indices = @transform_7, window_bounds = array<i64: 8, 1>}, {transform_indices = @transform_8, window_bounds = array<i64: 8, 128>}]} {
    %c0 = arith.constant 0 : index
    %c0_0 = arith.constant 0 : index
    %0 = vector.load %arg1[%c0, %c0_0] : memref<3x128xf32, #tpu.memory_space<vmem>>, vector<3x128xf32>
    %c0_1 = arith.constant 0 : index
    %c0_2 = arith.constant 0 : index
    %1 = vector.load %arg2[%c0_1, %c0_2] : memref<32x3xf32, #tpu.memory_space<vmem>>, vector<32x3xf32>
    %2 = vector.extract_strided_slice %1 {offsets = [0, 0], sizes = [32, 1], strides = [1, 1]} : vector<32x3xf32> to vector<32x1xf32>
    %3 = vector.extract_strided_slice %0 {offsets = [0, 0], sizes = [1, 128], strides = [1, 1]} : vector<3x128xf32> to vector<1x128xf32>
    %4 = vector.broadcast %2 : vector<32x1xf32> to vector<32x128xf32>
    %5 = vector.broadcast %3 : vector<1x128xf32> to vector<32x128xf32>
    %6 = arith.mulf %4, %5 : vector<32x128xf32>
    %7 = vector.extract_strided_slice %1 {offsets = [0, 1], sizes = [32, 1], strides = [1, 1]} : vector<32x3xf32> to vector<32x1xf32>
    %8 = vector.extract_strided_slice %0 {offsets = [1, 0], sizes = [1, 128], strides = [1, 1]} : vector<3x128xf32> to vector<1x128xf32>
    %9 = vector.broadcast %7 : vector<32x1xf32> to vector<32x128xf32>
    %10 = vector.broadcast %8 : vector<1x128xf32> to vector<32x128xf32>
    %11 = arith.mulf %9, %10 : vector<32x128xf32>
    %12 = arith.addf %6, %11 : vector<32x128xf32>
    %13 = vector.extract_strided_slice %1 {offsets = [0, 2], sizes = [32, 1], strides = [1, 1]} : vector<32x3xf32> to vector<32x1xf32>
    %14 = vector.extract_strided_slice %0 {offsets = [2, 0], sizes = [1, 128], strides = [1, 1]} : vector<3x128xf32> to vector<1x128xf32>
    %15 = vector.broadcast %13 : vector<32x1xf32> to vector<32x128xf32>
    %16 = vector.broadcast %14 : vector<1x128xf32> to vector<32x128xf32>
    %17 = arith.mulf %15, %16 : vector<32x128xf32>
    %18 = arith.addf %12, %17 : vector<32x128xf32>
    %19 = tpu.iota {dimensions = array<i32: 0>} : vector<32x128xi32>
    %c3_i32 = arith.constant 3 : i32
    %20 = vector.broadcast %c3_i32 : i32 to vector<32x128xi32>
    %21 = arith.cmpi slt, %19, %20 : vector<32x128xi32>
    %c15_i32 = arith.constant 15 : i32
    %22 = vector.broadcast %c15_i32 : i32 to vector<32x128xi32>
    %23 = arith.cmpi slt, %19, %22 : vector<32x128xi32>
    %24 = math.sin %18 : vector<32x128xf32>
    %c27_i32 = arith.constant 27 : i32
    %25 = vector.broadcast %c27_i32 : i32 to vector<32x128xi32>
    %26 = arith.cmpi slt, %19, %25 : vector<32x128xi32>
    %27 = math.cos %18 : vector<32x128xf32>
    %cst = arith.constant 0.000000e+00 : f32
    %28 = vector.broadcast %cst : f32 to vector<32x128xf32>
    %29 = arith.select %26, %27, %28 : vector<32x128xi1>, vector<32x128xf32>
    %30 = arith.select %23, %24, %29 : vector<32x128xi1>, vector<32x128xf32>
    %31 = arith.select %21, %18, %30 : vector<32x128xi1>, vector<32x128xf32>
    %c0_3 = arith.constant 0 : index
    %c0_4 = arith.constant 0 : index
    %32 = vector.load %arg3[%c0_3, %c0_4] : memref<64x32xf32, #tpu.memory_space<vmem>>, vector<64x32xf32>
    %cst_5 = arith.constant dense<0.000000e+00> : vector<64x128xf32>
    %33 = tpu.matmul %32, %31, %cst_5 {dimension_numbers = #tpu.dot_dimension_numbers<[1], [0], [0], [1], [0, 0, 1, 1], [], []>} : vector<64x32xf32>, vector<32x128xf32>, vector<64x128xf32> -> vector<64x128xf32>
    %c0_6 = arith.constant 0 : index
    %c0_7 = arith.constant 0 : index
    %34 = vector.load %arg4[%c0_6, %c0_7] : memref<64x1xf32, #tpu.memory_space<vmem>>, vector<64x1xf32>
    %35 = vector.broadcast %34 : vector<64x1xf32> to vector<64x128xf32>
    %36 = arith.addf %33, %35 : vector<64x128xf32>
    %cst_8 = arith.constant 0.000000e+00 : f32
    %37 = vector.broadcast %cst_8 : f32 to vector<64x128xf32>
    %38 = arith.maximumf %36, %37 : vector<64x128xf32>
    %c0_9 = arith.constant 0 : index
    %c0_10 = arith.constant 0 : index
    %39 = vector.load %arg5[%c0_9, %c0_10] : memref<64x64xf32, #tpu.memory_space<vmem>>, vector<64x64xf32>
    %cst_11 = arith.constant dense<0.000000e+00> : vector<64x128xf32>
    %40 = tpu.matmul %39, %38, %cst_11 {dimension_numbers = #tpu.dot_dimension_numbers<[1], [0], [0], [1], [0, 0, 1, 1], [], []>} : vector<64x64xf32>, vector<64x128xf32>, vector<64x128xf32> -> vector<64x128xf32>
    %c0_12 = arith.constant 0 : index
    %c0_13 = arith.constant 0 : index
    %41 = vector.load %arg6[%c0_12, %c0_13] : memref<64x1xf32, #tpu.memory_space<vmem>>, vector<64x1xf32>
    %42 = vector.broadcast %41 : vector<64x1xf32> to vector<64x128xf32>
    %43 = arith.addf %40, %42 : vector<64x128xf32>
    %cst_14 = arith.constant 0.000000e+00 : f32
    %44 = vector.broadcast %cst_14 : f32 to vector<64x128xf32>
    %45 = arith.maximumf %43, %44 : vector<64x128xf32>
    %c0_15 = arith.constant 0 : index
    %c0_16 = arith.constant 0 : index
    %46 = vector.load %arg7[%c0_15, %c0_16] : memref<8x64xf32, #tpu.memory_space<vmem>>, vector<8x64xf32>
    %cst_17 = arith.constant dense<0.000000e+00> : vector<8x128xf32>
    %47 = tpu.matmul %46, %45, %cst_17 {dimension_numbers = #tpu.dot_dimension_numbers<[1], [0], [0], [1], [0, 0, 1, 1], [], []>} : vector<8x64xf32>, vector<64x128xf32>, vector<8x128xf32> -> vector<8x128xf32>
    %c0_18 = arith.constant 0 : index
    %c0_19 = arith.constant 0 : index
    %48 = vector.load %arg8[%c0_18, %c0_19] : memref<8x1xf32, #tpu.memory_space<vmem>>, vector<8x1xf32>
    %49 = vector.broadcast %48 : vector<8x1xf32> to vector<8x128xf32>
    %50 = arith.addf %47, %49 : vector<8x128xf32>
    %51 = tpu.iota {dimensions = array<i32: 0>} : vector<8x128xi32>
    %c0_i32 = arith.constant 0 : i32
    %52 = vector.broadcast %c0_i32 : i32 to vector<8x128xi32>
    %53 = arith.cmpi eq, %51, %52 : vector<8x128xi32>
    %cst_20 = arith.constant 0.000000e+00 : f32
    %54 = vector.broadcast %cst_20 : f32 to vector<8x128xf32>
    %55 = arith.maximumf %50, %54 : vector<8x128xf32>
    %56 = vector.broadcast %cst_20 : f32 to vector<8x128xf32>
    %57 = arith.subf %50, %56 : vector<8x128xf32>
    %58 = arith.cmpf one, %57, %57 : vector<8x128xf32>
    %59 = vector.broadcast %cst_20 : f32 to vector<8x128xf32>
    %60 = arith.addf %50, %59 : vector<8x128xf32>
    %61 = math.absf %57 : vector<8x128xf32>
    %cst_21 = arith.constant 0.000000e+00 : f32
    %62 = vector.broadcast %cst_21 : f32 to vector<8x128xf32>
    %63 = arith.subf %62, %61 : vector<8x128xf32>
    %64 = math.exp %63 : vector<8x128xf32>
    %65 = math.log1p %64 : vector<8x128xf32>
    %66 = arith.addf %55, %65 : vector<8x128xf32>
    %67 = arith.select %58, %60, %66 : vector<8x128xi1>, vector<8x128xf32>
    %c4_i32 = arith.constant 4 : i32
    %68 = vector.broadcast %c4_i32 : i32 to vector<8x128xi32>
    %69 = arith.cmpi slt, %51, %68 : vector<8x128xi32>
    %70 = arith.negf %50 : vector<8x128xf32>
    %71 = math.exp %70 : vector<8x128xf32>
    %cst_22 = arith.constant 1.000000e+00 : f32
    %72 = vector.broadcast %cst_22 : f32 to vector<8x128xf32>
    %73 = arith.addf %72, %71 : vector<8x128xf32>
    %74 = arith.divf %72, %73 : vector<8x128xf32>
    %cst_23 = arith.constant 0.000000e+00 : f32
    %75 = vector.broadcast %cst_23 : f32 to vector<8x128xf32>
    %76 = arith.select %69, %74, %75 : vector<8x128xi1>, vector<8x128xf32>
    %77 = arith.select %53, %67, %76 : vector<8x128xi1>, vector<8x128xf32>
    %c0_24 = arith.constant 0 : index
    %c0_25 = arith.constant 0 : index
    %78 = vector.load %arg9[%c0_24, %c0_25] : memref<8x128xf32, #tpu.memory_space<vmem>>, vector<8x128xf32>
    tpu.vector_store %arg9[%c0_24, %c0_25], %77 {strides = array<i32>} : memref<8x128xf32, #tpu.memory_space<vmem>>, vector<8x128xf32>,
    return
  }
  func.func @transform_0(%arg0: i32) -> (i32, i32) {
    %c0_i32 = arith.constant 0 : i32
    %c0_i32_0 = arith.constant 0 : i32
    return %c0_i32, %arg0 : i32, i32
  }
  func.func @transform_1(%arg0: i32) -> (i32, i32) {
    %c0_i32 = arith.constant 0 : i32
    %c0_i32_0 = arith.constant 0 : i32
    %c0_i32_1 = arith.constant 0 : i32
    return %c0_i32, %c0_i32_0 : i32, i32
  }
  func.func @transform_2(%arg0: i32) -> (i32, i32) {
    %c0_i32 = arith.constant 0 : i32
    %c0_i32_0 = arith.constant 0 : i32
    %c0_i32_1 = arith.constant 0 : i32
    return %c0_i32, %c0_i32_0 : i32, i32
  }
  func.func @transform_3(%arg0: i32) -> (i32, i32) {
    %c0_i32 = arith.constant 0 : i32
    %c0_i32_0 = arith.constant 0 : i32
    %c0_i32_1 = arith.constant 0 : i32
    return %c0_i32, %c0_i32_0 : i32, i32
  }
  func.func @transform_4(%arg0: i32) -> (i32, i32) {
    %c0_i32 = arith.constant 0 : i32
    %c0_i32_0 = arith.constant 0 : i32
    %c0_i32_1 = arith.constant 0 : i32
    return %c0_i32, %c0_i32_0 : i32, i32
  }
  func.func @transform_5(%arg0: i32) -> (i32, i32) {
    %c0_i32 = arith.constant 0 : i32
    %c0_i32_0 = arith.constant 0 : i32
    %c0_i32_1 = arith.constant 0 : i32
    return %c0_i32, %c0_i32_0 : i32, i32
  }
  func.func @transform_6(%arg0: i32) -> (i32, i32) {
    %c0_i32 = arith.constant 0 : i32
    %c0_i32_0 = arith.constant 0 : i32
    %c0_i32_1 = arith.constant 0 : i32
    return %c0_i32, %c0_i32_0 : i32, i32
  }
  func.func @transform_7(%arg0: i32) -> (i32, i32) {
    %c0_i32 = arith.constant 0 : i32
    %c0_i32_0 = arith.constant 0 : i32
    %c0_i32_1 = arith.constant 0 : i32
    return %c0_i32, %c0_i32_0 : i32, i32
  }
  func.func @transform_8(%arg0: i32) -> (i32, i32) {
    %c0_i32 = arith.constant 0 : i32
    %c0_i32_0 = arith.constant 0 : i32
    return %c0_i32, %arg0 : i32, i32
  }
}

</mosaic_0001>

<llo_original>
// kernel: neraf_vision_field_value.1
$region0: #{neraf_vision_field_value.1}
  #allocation0 [shape = 'u32[]', space=smem, size = 0x4, offset = 0x4, fixed_abs, tag = 'smem constant byte address 0x4 - core index']
  #allocation1 [shape = 'u32[144,128]{1,0:T(1,128)}', space=vmem, size = 0x12000, scoped, tag = 'internal scratch']
  %s0 = inlined_call_operand.vmem [shape: f32[3,128], index: 0, kind: input, shape index: {}]
  %s1 = inlined_call_operand.vmem [shape: f32[32,3], index: 1, kind: input, shape index: {}]
  %s2 = inlined_call_operand.vmem [shape: f32[64,32], index: 2, kind: input, shape index: {}]
  %s3 = inlined_call_operand.vmem [shape: f32[64,1], index: 3, kind: input, shape index: {}]
  %s4 = inlined_call_operand.vmem [shape: f32[64,64], index: 4, kind: input, shape index: {}]
  %s5 = inlined_call_operand.vmem [shape: f32[64,1], index: 5, kind: input, shape index: {}]
  %s6 = inlined_call_operand.vmem [shape: f32[8,64], index: 6, kind: input, shape index: {}]
  %s7 = inlined_call_operand.vmem [shape: f32[8,1], index: 7, kind: input, shape index: {}]
  %s8 = inlined_call_operand.vmem [shape: f32[8,128], index: 8, kind: output, shape index: {}]
  %s9 = sld [smem:[#allocation0]]
  $region42: #{neraf_vision_field_value.1} parent=0
    _
  %s11 = ssub.s32 1, %s9
  %s12 = scalar_select 0, %s11, %s9
  // Predicated region
  $region2: #{neraf_vision_field_value.1} parent=0 // pred_check
    _
  $region3: #{neraf_vision_field_value.1} parent=0 // pred_check_branch
    %14 = sbr.rel (0) target = $region5
  $region4: #{neraf_vision_field_value.1} parent=0 // pred_region
    _
  $region5: #{neraf_vision_field_value.1} parent=0 // pred_fallthru
    _
  // Predicated region
  $region6: #{neraf_vision_field_value.1} parent=0 // pred_check
    _
  $region7: #{neraf_vision_field_value.1} parent=0 // pred_check_branch
    %16 = sbr.rel (0) target = $region9
  $region8: #{neraf_vision_field_value.1} parent=0 // pred_region
    _
  $region9: #{neraf_vision_field_value.1} parent=0 // pred_fallthru
    _
  // Predicated region
  $region10: #{neraf_vision_field_value.1} parent=0 // pred_check
    _
  $region11: #{neraf_vision_field_value.1} parent=0 // pred_check_branch
    %18 = sbr.rel (0) target = $region13
  $region12: #{neraf_vision_field_value.1} parent=0 // pred_region
    _
  $region13: #{neraf_vision_field_value.1} parent=0 // pred_fallthru
    _
  // Predicated region
  $region14: #{neraf_vision_field_value.1} parent=0 // pred_check
    _
  $region15: #{neraf_vision_field_value.1} parent=0 // pred_check_branch
    %20 = sbr.rel (0) target = $region17
  $region16: #{neraf_vision_field_value.1} parent=0 // pred_region
    _
  $region17: #{neraf_vision_field_value.1} parent=0 // pred_fallthru
    _
  // Predicated region
  $region18: #{neraf_vision_field_value.1} parent=0 // pred_check
    _
  $region19: #{neraf_vision_field_value.1} parent=0 // pred_check_branch
    %22 = sbr.rel (0) target = $region21
  $region20: #{neraf_vision_field_value.1} parent=0 // pred_region
    _
  $region21: #{neraf_vision_field_value.1} parent=0 // pred_fallthru
    _
  // Predicated region
  $region22: #{neraf_vision_field_value.1} parent=0 // pred_check
    _
  $region23: #{neraf_vision_field_value.1} parent=0 // pred_check_branch
    %24 = sbr.rel (0) target = $region25
  $region24: #{neraf_vision_field_value.1} parent=0 // pred_region
    _
  $region25: #{neraf_vision_field_value.1} parent=0 // pred_fallthru
    _
  // Predicated region
  $region26: #{neraf_vision_field_value.1} parent=0 // pred_check
    _
  $region27: #{neraf_vision_field_value.1} parent=0 // pred_check_branch
    %26 = sbr.rel (0) target = $region29
  $region28: #{neraf_vision_field_value.1} parent=0 // pred_region
    _
  $region29: #{neraf_vision_field_value.1} parent=0 // pred_fallthru
    _
  // Predicated region
  $region30: #{neraf_vision_field_value.1} parent=0 // pred_check
    _
  $region31: #{neraf_vision_field_value.1} parent=0 // pred_check_branch
    %28 = sbr.rel (0) target = $region33
  $region32: #{neraf_vision_field_value.1} parent=0 // pred_region
    _
  $region33: #{neraf_vision_field_value.1} parent=0 // pred_fallthru
    _
  %v29 = vld [vmem:[%s0] sm:$0x7]
  %v30 = vld [vmem:[%s1] sm:$0xff]
  %v31 = vld [vmem:[%s1 + $0x8] sm:$0xff]
  %v32 = vld [vmem:[%s1 + $0x10] sm:$0xff]
  %v33 = vld [vmem:[%s1 + $0x18] sm:$0xff]
  %35 = vset.pattern.permute.xlu0 0
  %36 = vperm.xlu0 %35, %v30
  %v37 = vpop.permute.xlu0 %36
  %40 = vset.pattern.permute.xlu0 0
  %41 = vperm.xlu0 %40, %v31
  %v42 = vpop.permute.xlu0 %41
  %45 = vset.pattern.permute.xlu0 0
  %46 = vperm.xlu0 %45, %v32
  %v47 = vpop.permute.xlu0 %46
  %50 = vset.pattern.permute.xlu0 0
  %51 = vperm.xlu0 %50, %v33
  %v52 = vpop.permute.xlu0 %51
  %v54 = vlaneseq
  %v55 = vshrl.u32 %v54, 7
  %v56 = vsub.s32 0, %v55
  %v57 = vrot.slane %v29, %v56
  %v58 = vmul.f32 %v37, %v57
  %v59 = vmul.f32 %v42, %v57
  %v60 = vmul.f32 %v47, %v57
  %v61 = vmul.f32 %v52, %v57
  %62 = vset.pattern.permute.xlu0 1
  %63 = vperm.xlu0 %62, %v30
  %v64 = vpop.permute.xlu0 %63
  %66 = vset.pattern.permute.xlu0 1
  %67 = vperm.xlu0 %66, %v31
  %v68 = vpop.permute.xlu0 %67
  %70 = vset.pattern.permute.xlu0 1
  %71 = vperm.xlu0 %70, %v32
  %v72 = vpop.permute.xlu0 %71
  %74 = vset.pattern.permute.xlu0 1
  %75 = vperm.xlu0 %74, %v33
  %v76 = vpop.permute.xlu0 %75
  %v78 = vlaneseq
  %v79 = vshrl.u32 %v78, 7
  %v80 = vsub.s32 1, %v79
  %v81 = vrot.slane %v29, %v80
  %v82 = vmul.f32 %v64, %v81
  %v83 = vmul.f32 %v68, %v81
  %v84 = vmul.f32 %v72, %v81
  %v85 = vmul.f32 %v76, %v81
  %v86 = vadd.f32 %v58, %v82
  %v87 = vadd.f32 %v59, %v83
  %v88 = vadd.f32 %v60, %v84
  %v89 = vadd.f32 %v61, %v85
  %90 = vset.pattern.permute.xlu0 2
  %91 = vperm.xlu0 %90, %v30
  %v92 = vpop.permute.xlu0 %91
  %94 = vset.pattern.permute.xlu0 2
  %95 = vperm.xlu0 %94, %v31
  %v96 = vpop.permute.xlu0 %95
  %98 = vset.pattern.permute.xlu0 2
  %99 = vperm.xlu0 %98, %v32
  %v100 = vpop.permute.xlu0 %99
  %102 = vset.pattern.permute.xlu0 2
  %103 = vperm.xlu0 %102, %v33
  %v104 = vpop.permute.xlu0 %103
  %v106 = vlaneseq
  %v107 = vshrl.u32 %v106, 7
  %v108 = vsub.s32 2, %v107
  %v109 = vrot.slane %v29, %v108
  %v110 = vmul.f32 %v92, %v109
  %v111 = vmul.f32 %v96, %v109
  %v112 = vmul.f32 %v100, %v109
  %v113 = vmul.f32 %v104, %v109
  %v114 = vadd.f32 %v86, %v110
  %v115 = vadd.f32 %v87, %v111
  %v116 = vadd.f32 %v88, %v112
  %v117 = vadd.f32 %v89, %v113
  %v118 = vlaneseq
  %v119 = vshrl.u32 %v118, 7
  %v120 = vadd.s32 %v119, 8
  %v121 = vadd.s32 %v119, 16
  %v122 = vadd.s32 %v119, 24
  %vm123 = vcmp.lt.s32.totalorder %v119, 3
  %vm124 = vcmp.lt.s32.totalorder %v120, 3
  %vm125 = vcmp.lt.s32.totalorder %v121, 3
  %vm126 = vcmp.lt.s32.totalorder %v122, 3
  %vm127 = vcmp.lt.s32.totalorder %v119, 15
  %vm128 = vcmp.lt.s32.totalorder %v120, 15
  %vm129 = vcmp.lt.s32.totalorder %v121, 15
  %vm130 = vcmp.lt.s32.totalorder %v122, 15
  %v131 = vand.u32 2147483647, %v114
  %vm132 = vcmp.le.f32.partialorder %v131, 0.7853982
  %vm133 = vcmp.lt.s32.totalorder %v114, 0
  %v134 = vand.u32 %v114, 2139095040
  %v135 = vshrl.u32 %v134, 23
  %v136 = vsub.s32 %v135, 127
  %v137 = vand.u32 2147483647, %v114
  %v138 = vand.u32 %v137, 8388607
  %v139 = vor.u32 %v138, 8388608
  %v140 = vsub.s32 0, %v139
  %v141 = vadd.s32 %v136, 1
  %vm142 = vcmp.gt.s32.totalorder %v141, 0
  %v143 = vsel %vm142, %v141, 0
  %v144 = vshrl.u32 %v143, 5
  %v145 = vand.u32 %v143, 31
  %v146 = vsub.s32 32, %v145
  %v147 = vshrl.u32 683565275, %v146
  %v148 = vshll.u32 683565275, %v145
  %v149 = vshrl.u32 2475754826, %v146
  %v150 = vor.u32 %v148, %v149
  %v151 = vshll.u32 2475754826, %v145
  %v152 = vshrl.u32 2131351028, %v146
  %v153 = vor.u32 %v151, %v152
  %v154 = vshll.u32 2131351028, %v145
  %v155 = vshrl.u32 2102212464, %v146
  %v156 = vor.u32 %v154, %v155
  %v157 = vshll.u32 2102212464, %v145
  %v158 = vshrl.u32 920167782, %v146
  %v159 = vor.u32 %v157, %v158
  %v160 = vshll.u32 920167782, %v145
  %v161 = vshrl.u32 1326507024, %v146
  %v162 = vor.u32 %v160, %v161
  %vm163 = vcmp.lt.s32.totalorder %v144, 1
  %vm164 = vcmp.lt.s32.totalorder %v144, 2
  %vm165 = vcmp.lt.s32.totalorder %v144, 3
  %vm166 = vcmp.lt.s32.totalorder %v144, 4
  %v167 = vsel %vm163, %v147, %v150
  %v168 = vsel %vm166, %v156, 2102212464
  %v169 = vsel %vm165, %v153, %v168
  %v170 = vsel %vm164, %v167, %v169
  %v171 = vsel %vm163, %v150, %v153
  %v172 = vsel %vm166, %v159, 920167782
  %v173 = vsel %vm165, %v156, %v172
  %v174 = vsel %vm164, %v171, %v173
  %v175 = vsel %vm163, %v153, %v156
  %v176 = vsel %vm166, %v162, 1326507024
  %v177 = vsel %vm165, %v159, %v176
  %v178 = vsel %vm164, %v175, %v177
  %v179 = vshll.u32 %v139, 8
  %v180 = vmul.u32.u64.compose %v179, %v178
  %v181 = vextract.low.u32 %v180
  %v182 = vextract.high.u32 %v180
  %v183 = vmul.u32.u64.compose %v179, %v174
  %v184 = vextract.low.u32 %v183
  %v185 = vextract.high.u32 %v183
  %v186 = vmul.u32 %v179, %v170
  %v187 = vadd.s32 %v182, %v184
  %vm188 = vc.u32 %v182, %v184
  %v189 = vadd.s32 %v185, 1
  %v190 = vsel %vm188, %v189, %v185
  %v191 = vadd.s32 %v186, %v190
  %v192 = vadd.s32 %v191, 536870912
  %v193 = vshrl.u32 %v192, 30
  %v194 = vshll.u32 %v193, 30
  %v195 = vsub.s32 %v191, %v194
  %vm196 = vcmp.lt.s32.totalorder %v195, 0
  %v197 = vsub.s32 0, %v195
  %v198 = vsel %vm196, %v197, %v195
  %v199 = vclz %v198
  %v200 = vsub.s32 %v199, 2
  %vm201 = vcmp.gt.s32.totalorder 0, %v200
  %v202 = vsel %vm201, 0, %v200
  %v203 = vsub.s32 32, %v202
  %v204 = vshll.u32 %v195, %v202
  %v205 = vshrl.u32 %v187, %v203
  %v206 = vor.u32 %v204, %v205
  %v207 = vsub.s32 4294967266, %v202
  %v208 = vadd.s32 %v207, 127
  %v209 = vshll.u32 %v208, 23
  %v210 = vor.u32 4788187, %v209
  %v211 = vand.u32 2147483647, %v210
  %v213 = vcvt.s32.f32 %v206
  %v214 = vmul.f32 %v213, %v211
  %v215 = vxor.u32 %v214, 2147483648
  %v216 = vsel %vm133, %v215, %v214
  %v217 = vsub.s32 4, %v193
  %v218 = vsel %vm133, %v217, %v193
  %v219 = vsel %vm132, %v114, %v216
  %v220 = vsel %vm132, 0, %v218
  %v221 = vcosq.f32.pop %v219
  %v222 = vsinq.f32.pop %v219
  %vm223 = vweird.f32 %v114
  %v224 = vadd.s32 %v220, 3
  %v225 = vand.u32 %v224, 3
  %vm226 = vcmp.lt.s32.totalorder %v225, 2
  %vm227 = vcmp.eq.s32.totalorder %v225, 0
  %v228 = vxor.u32 %v222, 2147483648
  %v229 = vsel %vm227, %v221, %v228
  %vm230 = vcmp.eq.s32.totalorder %v225, 2
  %v231 = vxor.u32 %v221, 2147483648
  %v232 = vsel %vm230, %v231, %v222
  %v233 = vsel %vm226, %v229, %v232
  %v234 = vsel %vm223, nan, %v233
  %v235 = vand.u32 2147483647, %v115
  %vm236 = vcmp.le.f32.partialorder %v235, 0.7853982
  %vm237 = vcmp.lt.s32.totalorder %v115, 0
  %v238 = vand.u32 %v115, 2139095040
  %v239 = vshrl.u32 %v238, 23
  %v240 = vsub.s32 %v239, 127
  %v241 = vand.u32 2147483647, %v115
  %v242 = vand.u32 %v241, 8388607
  %v243 = vor.u32 %v242, 8388608
  %v244 = vsub.s32 0, %v243
  %v245 = vadd.s32 %v240, 1
  %vm246 = vcmp.gt.s32.totalorder %v245, 0
  %v247 = vsel %vm246, %v245, 0
  %v248 = vshrl.u32 %v247, 5
  %v249 = vand.u32 %v247, 31
  %v250 = vsub.s32 32, %v249
  %v251 = vshrl.u32 683565275, %v250
  %v252 = vshll.u32 683565275, %v249
  %v253 = vshrl.u32 2475754826, %v250
  %v254 = vor.u32 %v252, %v253
  %v255 = vshll.u32 2475754826, %v249
  %v256 = vshrl.u32 2131351028, %v250
  %v257 = vor.u32 %v255, %v256
  %v258 = vshll.u32 2131351028, %v249
  %v259 = vshrl.u32 2102212464, %v250
  %v260 = vor.u32 %v258, %v259
  %v261 = vshll.u32 2102212464, %v249
  %v262 = vshrl.u32 920167782, %v250
  %v263 = vor.u32 %v261, %v262
  %v264 = vshll.u32 920167782, %v249
  %v265 = vshrl.u32 1326507024, %v250
  %v266 = vor.u32 %v264, %v265
  %vm267 = vcmp.lt.s32.totalorder %v248, 1
  %vm268 = vcmp.lt.s32.totalorder %v248, 2
  %vm269 = vcmp.lt.s32.totalorder %v248, 3
  %vm270 = vcmp.lt.s32.totalorder %v248, 4
  %v271 = vsel %vm267, %v251, %v254
  %v272 = vsel %vm270, %v260, 2102212464
  %v273 = vsel %vm269, %v257, %v272
  %v274 = vsel %vm268, %v271, %v273
  %v275 = vsel %vm267, %v254, %v257
  %v276 = vsel %vm270, %v263, 920167782
  %v277 = vsel %vm269, %v260, %v276
  %v278 = vsel %vm268, %v275, %v277
  %v279 = vsel %vm267, %v257, %v260
  %v280 = vsel %vm270, %v266, 1326507024
  %v281 = vsel %vm269, %v263, %v280
  %v282 = vsel %vm268, %v279, %v281
  %v283 = vshll.u32 %v243, 8
  %v284 = vmul.u32.u64.compose %v283, %v282
  %v285 = vextract.low.u32 %v284
  %v286 = vextract.high.u32 %v284
  %v287 = vmul.u32.u64.compose %v283, %v278
  %v288 = vextract.low.u32 %v287
  %v289 = vextract.high.u32 %v287
  %v290 = vmul.u32 %v283, %v274
  %v291 = vadd.s32 %v286, %v288
  %vm292 = vc.u32 %v286, %v288
  %v293 = vadd.s32 %v289, 1
  %v294 = vsel %vm292, %v293, %v289
  %v295 = vadd.s32 %v290, %v294
  %v296 = vadd.s32 %v295, 536870912
  %v297 = vshrl.u32 %v296, 30
  %v298 = vshll.u32 %v297, 30
  %v299 = vsub.s32 %v295, %v298
  %vm300 = vcmp.lt.s32.totalorder %v299, 0
  %v301 = vsub.s32 0, %v299
  %v302 = vsel %vm300, %v301, %v299
  %v303 = vclz %v302
  %v304 = vsub.s32 %v303, 2
  %vm305 = vcmp.gt.s32.totalorder 0, %v304
  %v306 = vsel %vm305, 0, %v304
  %v307 = vsub.s32 32, %v306
  %v308 = vshll.u32 %v299, %v306
  %v309 = vshrl.u32 %v291, %v307
  %v310 = vor.u32 %v308, %v309
  %v311 = vsub.s32 4294967266, %v306
  %v312 = vadd.s32 %v311, 127
  %v313 = vshll.u32 %v312, 23
  %v314 = vor.u32 4788187, %v313
  %v315 = vand.u32 2147483647, %v314
  %v317 = vcvt.s32.f32 %v310
  %v318 = vmul.f32 %v317, %v315
  %v319 = vxor.u32 %v318, 2147483648
  %v320 = vsel %vm237, %v319, %v318
  %v321 = vsub.s32 4, %v297
  %v322 = vsel %vm237, %v321, %v297
  %v323 = vsel %vm236, %v115, %v320
  %v324 = vsel %vm236, 0, %v322
  %v325 = vcosq.f32.pop %v323
  %v326 = vsinq.f32.pop %v323
  %vm327 = vweird.f32 %v115
  %v328 = vadd.s32 %v324, 3
  %v329 = vand.u32 %v328, 3
  %vm330 = vcmp.lt.s32.totalorder %v329, 2
  %vm331 = vcmp.eq.s32.totalorder %v329, 0
  %v332 = vxor.u32 %v326, 2147483648
  %v333 = vsel %vm331, %v325, %v332
  %vm334 = vcmp.eq.s32.totalorder %v329, 2
  %v335 = vxor.u32 %v325, 2147483648
  %v336 = vsel %vm334, %v335, %v326
  %v337 = vsel %vm330, %v333, %v336
  %v338 = vsel %vm327, nan, %v337
  %v339 = vand.u32 2147483647, %v116
  %vm340 = vcmp.le.f32.partialorder %v339, 0.7853982
  %vm341 = vcmp.lt.s32.totalorder %v116, 0
  %v342 = vand.u32 %v116, 2139095040
  %v343 = vshrl.u32 %v342, 23
  %v344 = vsub.s32 %v343, 127
  %v345 = vand.u32 2147483647, %v116
  %v346 = vand.u32 %v345, 8388607
  %v347 = vor.u32 %v346, 8388608
  %v348 = vsub.s32 0, %v347
  %v349 = vadd.s32 %v344, 1
  %vm350 = vcmp.gt.s32.totalorder %v349, 0
  %v351 = vsel %vm350, %v349, 0
  %v352 = vshrl.u32 %v351, 5
  %v353 = vand.u32 %v351, 31
  %v354 = vsub.s32 32, %v353
  %v355 = vshrl.u32 683565275, %v354
  %v356 = vshll.u32 683565275, %v353
  %v357 = vshrl.u32 2475754826, %v354
  %v358 = vor.u32 %v356, %v357
  %v359 = vshll.u32 2475754826, %v353
  %v360 = vshrl.u32 2131351028, %v354
  %v361 = vor.u32 %v359, %v360
  %v362 = vshll.u32 2131351028, %v353
  %v363 = vshrl.u32 2102212464, %v354
  %v364 = vor.u32 %v362, %v363
  %v365 = vshll.u32 2102212464, %v353
  %v366 = vshrl.u32 920167782, %v354
  %v367 = vor.u32 %v365, %v366
  %v368 = vshll.u32 920167782, %v353
  %v369 = vshrl.u32 1326507024, %v354
  %v370 = vor.u32 %v368, %v369
  %vm371 = vcmp.lt.s32.totalorder %v352, 1
  %vm372 = vcmp.lt.s32.totalorder %v352, 2
  %vm373 = vcmp.lt.s32.totalorder %v352, 3
  %vm374 = vcmp.lt.s32.totalorder %v352, 4
  %v375 = vsel %vm371, %v355, %v358
  %v376 = vsel %vm374, %v364, 2102212464
  %v377 = vsel %vm373, %v361, %v376
  %v378 = vsel %vm372, %v375, %v377
  %v379 = vsel %vm371, %v358, %v361
  %v380 = vsel %vm374, %v367, 920167782
  %v381 = vsel %vm373, %v364, %v380
  %v382 = vsel %vm372, %v379, %v381
  %v383 = vsel %vm371, %v361, %v364
  %v384 = vsel %vm374, %v370, 1326507024
  %v385 = vsel %vm373, %v367, %v384
  %v386 = vsel %vm372, %v383, %v385
  %v387 = vshll.u32 %v347, 8
  %v388 = vmul.u32.u64.compose %v387, %v386
  %v389 = vextract.low.u32 %v388
  %v390 = vextract.high.u32 %v388
  %v391 = vmul.u32.u64.compose %v387, %v382
  %v392 = vextract.low.u32 %v391
  %v393 = vextract.high.u32 %v391
  %v394 = vmul.u32 %v387, %v378
  %v395 = vadd.s32 %v390, %v392
  %vm396 = vc.u32 %v390, %v392
  %v397 = vadd.s32 %v393, 1
  %v398 = vsel %vm396, %v397, %v393
  %v399 = vadd.s32 %v394, %v398
  %v400 = vadd.s32 %v399, 536870912
  %v401 = vshrl.u32 %v400, 30
  %v402 = vshll.u32 %v401, 30
  %v403 = vsub.s32 %v399, %v402
  %vm404 = vcmp.lt.s32.totalorder %v403, 0
  %v405 = vsub.s32 0, %v403
  %v406 = vsel %vm404, %v405, %v403
  %v407 = vclz %v406
  %v408 = vsub.s32 %v407, 2
  %vm409 = vcmp.gt.s32.totalorder 0, %v408
  %v410 = vsel %vm409, 0, %v408
  %v411 = vsub.s32 32, %v410
  %v412 = vshll.u32 %v403, %v410
  %v413 = vshrl.u32 %v395, %v411
  %v414 = vor.u32 %v412, %v413
  %v415 = vsub.s32 4294967266, %v410
  %v416 = vadd.s32 %v415, 127
  %v417 = vshll.u32 %v416, 23
  %v418 = vor.u32 4788187, %v417
  %v419 = vand.u32 2147483647, %v418
  %v421 = vcvt.s32.f32 %v414
  %v422 = vmul.f32 %v421, %v419
  %v423 = vxor.u32 %v422, 2147483648
  %v424 = vsel %vm341, %v423, %v422
  %v425 = vsub.s32 4, %v401
  %v426 = vsel %vm341, %v425, %v401
  %v427 = vsel %vm340, %v116, %v424
  %v428 = vsel %vm340, 0, %v426
  %v429 = vcosq.f32.pop %v427
  %v430 = vsinq.f32.pop %v427
  %vm431 = vweird.f32 %v116
  %v432 = vadd.s32 %v428, 3
  %v433 = vand.u32 %v432, 3
  %vm434 = vcmp.lt.s32.totalorder %v433, 2
  %vm435 = vcmp.eq.s32.totalorder %v433, 0
  %v436 = vxor.u32 %v430, 2147483648
  %v437 = vsel %vm435, %v429, %v436
  %vm438 = vcmp.eq.s32.totalorder %v433, 2
  %v439 = vxor.u32 %v429, 2147483648
  %v440 = vsel %vm438, %v439, %v430
  %v441 = vsel %vm434, %v437, %v440
  %v442 = vsel %vm431, nan, %v441
  %v443 = vand.u32 2147483647, %v117
  %vm444 = vcmp.le.f32.partialorder %v443, 0.7853982
  %vm445 = vcmp.lt.s32.totalorder %v117, 0
  %v446 = vand.u32 %v117, 2139095040
  %v447 = vshrl.u32 %v446, 23
  %v448 = vsub.s32 %v447, 127
  %v449 = vand.u32 2147483647, %v117
  %v450 = vand.u32 %v449, 8388607
  %v451 = vor.u32 %v450, 8388608
  %v452 = vsub.s32 0, %v451
  %v453 = vadd.s32 %v448, 1
  %vm454 = vcmp.gt.s32.totalorder %v453, 0
  %v455 = vsel %vm454, %v453, 0
  %v456 = vshrl.u32 %v455, 5
  %v457 = vand.u32 %v455, 31
  %v458 = vsub.s32 32, %v457
  %v459 = vshrl.u32 683565275, %v458
  %v460 = vshll.u32 683565275, %v457
  %v461 = vshrl.u32 2475754826, %v458
  %v462 = vor.u32 %v460, %v461
  %v463 = vshll.u32 2475754826, %v457
  %v464 = vshrl.u32 2131351028, %v458
  %v465 = vor.u32 %v463, %v464
  %v466 = vshll.u32 2131351028, %v457
  %v467 = vshrl.u32 2102212464, %v458
  %v468 = vor.u32 %v466, %v467
  %v469 = vshll.u32 2102212464, %v457
  %v470 = vshrl.u32 920167782, %v458
  %v471 = vor.u32 %v469, %v470
  %v472 = vshll.u32 920167782, %v457
  %v473 = vshrl.u32 1326507024, %v458
  %v474 = vor.u32 %v472, %v473
  %vm475 = vcmp.lt.s32.totalorder %v456, 1
  %vm476 = vcmp.lt.s32.totalorder %v456, 2
  %vm477 = vcmp.lt.s32.totalorder %v456, 3
  %vm478 = vcmp.lt.s32.totalorder %v456, 4
  %v479 = vsel %vm475, %v459, %v462
  %v480 = vsel %vm478, %v468, 2102212464
  %v481 = vsel %vm477, %v465, %v480
  %v482 = vsel %vm476, %v479, %v481
  %v483 = vsel %vm475, %v462, %v465
  %v484 = vsel %vm478, %v471, 920167782
  %v485 = vsel %vm477, %v468, %v484
  %v486 = vsel %vm476, %v483, %v485
  %v487 = vsel %vm475, %v465, %v468
  %v488 = vsel %vm478, %v474, 1326507024
  %v489 = vsel %vm477, %v471, %v488
  %v490 = vsel %vm476, %v487, %v489
  %v491 = vshll.u32 %v451, 8
  %v492 = vmul.u32.u64.compose %v491, %v490
  %v493 = vextract.low.u32 %v492
  %v494 = vextract.high.u32 %v492
  %v495 = vmul.u32.u64.compose %v491, %v486
  %v496 = vextract.low.u32 %v495
  %v497 = vextract.high.u32 %v495
  %v498 = vmul.u32 %v491, %v482
  %v499 = vadd.s32 %v494, %v496
  %vm500 = vc.u32 %v494, %v496
  %v501 = vadd.s32 %v497, 1
  %v502 = vsel %vm500, %v501, %v497
  %v503 = vadd.s32 %v498, %v502
  %v504 = vadd.s32 %v503, 536870912
  %v505 = vshrl.u32 %v504, 30
  %v506 = vshll.u32 %v505, 30
  %v507 = vsub.s32 %v503, %v506
  %vm508 = vcmp.lt.s32.totalorder %v507, 0
  %v509 = vsub.s32 0, %v507
  %v510 = vsel %vm508, %v509, %v507
  %v511 = vclz %v510
  %v512 = vsub.s32 %v511, 2
  %vm513 = vcmp.gt.s32.totalorder 0, %v512
  %v514 = vsel %vm513, 0, %v512
  %v515 = vsub.s32 32, %v514
  %v516 = vshll.u32 %v507, %v514
  %v517 = vshrl.u32 %v499, %v515
  %v518 = vor.u32 %v516, %v517
  %v519 = vsub.s32 4294967266, %v514
  %v520 = vadd.s32 %v519, 127
  %v521 = vshll.u32 %v520, 23
  %v522 = vor.u32 4788187, %v521
  %v523 = vand.u32 2147483647, %v522
  %v525 = vcvt.s32.f32 %v518
  %v526 = vmul.f32 %v525, %v523
  %v527 = vxor.u32 %v526, 2147483648
  %v528 = vsel %vm445, %v527, %v526
  %v529 = vsub.s32 4, %v505
  %v530 = vsel %vm445, %v529, %v505
  %v531 = vsel %vm444, %v117, %v528
  %v532 = vsel %vm444, 0, %v530
  %v533 = vcosq.f32.pop %v531
  %v534 = vsinq.f32.pop %v531
  %vm535 = vweird.f32 %v117
  %v536 = vadd.s32 %v532, 3
  %v537 = vand.u32 %v536, 3
  %vm538 = vcmp.lt.s32.totalorder %v537, 2
  %vm539 = vcmp.eq.s32.totalorder %v537, 0
  %v540 = vxor.u32 %v534, 2147483648
  %v541 = vsel %vm539, %v533, %v540
  %vm542 = vcmp.eq.s32.totalorder %v537, 2
  %v543 = vxor.u32 %v533, 2147483648
  %v544 = vsel %vm542, %v543, %v534
  %v545 = vsel %vm538, %v541, %v544
  %v546 = vsel %vm535, nan, %v545
  %vm547 = vcmp.lt.s32.totalorder %v119, 27
  %vm548 = vcmp.lt.s32.totalorder %v120, 27
  %vm549 = vcmp.lt.s32.totalorder %v121, 27
  %vm550 = vcmp.lt.s32.totalorder %v122, 27
  %v551 = vand.u32 2147483647, %v114
  %vm552 = vcmp.le.f32.partialorder %v551, 0.7853982
  %vm553 = vcmp.lt.s32.totalorder %v114, 0
  %v554 = vand.u32 %v114, 2139095040
  %v555 = vshrl.u32 %v554, 23
  %v556 = vsub.s32 %v555, 127
  %v557 = vand.u32 2147483647, %v114
  %v558 = vand.u32 %v557, 8388607
  %v559 = vor.u32 %v558, 8388608
  %v560 = vsub.s32 0, %v559
  %v561 = vadd.s32 %v556, 1
  %vm562 = vcmp.gt.s32.totalorder %v561, 0
  %v563 = vsel %vm562, %v561, 0
  %v564 = vshrl.u32 %v563, 5
  %v565 = vand.u32 %v563, 31
  %v566 = vsub.s32 32, %v565
  %v567 = vshrl.u32 683565275, %v566
  %v568 = vshll.u32 683565275, %v565
  %v569 = vshrl.u32 2475754826, %v566
  %v570 = vor.u32 %v568, %v569
  %v571 = vshll.u32 2475754826, %v565
  %v572 = vshrl.u32 2131351028, %v566
  %v573 = vor.u32 %v571, %v572
  %v574 = vshll.u32 2131351028, %v565
  %v575 = vshrl.u32 2102212464, %v566
  %v576 = vor.u32 %v574, %v575
  %v577 = vshll.u32 2102212464, %v565
  %v578 = vshrl.u32 920167782, %v566
  %v579 = vor.u32 %v577, %v578
  %v580 = vshll.u32 920167782, %v565
  %v581 = vshrl.u32 1326507024, %v566
  %v582 = vor.u32 %v580, %v581
  %vm583 = vcmp.lt.s32.totalorder %v564, 1
  %vm584 = vcmp.lt.s32.totalorder %v564, 2
  %vm585 = vcmp.lt.s32.totalorder %v564, 3
  %vm586 = vcmp.lt.s32.totalorder %v564, 4
  %v587 = vsel %vm583, %v567, %v570
  %v588 = vsel %vm586, %v576, 2102212464
  %v589 = vsel %vm585, %v573, %v588
  %v590 = vsel %vm584, %v587, %v589
  %v591 = vsel %vm583, %v570, %v573
  %v592 = vsel %vm586, %v579, 920167782
  %v593 = vsel %vm585, %v576, %v592
  %v594 = vsel %vm584, %v591, %v593
  %v595 = vsel %vm583, %v573, %v576
  %v596 = vsel %vm586, %v582, 1326507024
  %v597 = vsel %vm585, %v579, %v596
  %v598 = vsel %vm584, %v595, %v597
  %v599 = vshll.u32 %v559, 8
  %v600 = vmul.u32.u64.compose %v599, %v598
  %v601 = vextract.low.u32 %v600
  %v602 = vextract.high.u32 %v600
  %v603 = vmul.u32.u64.compose %v599, %v594
  %v604 = vextract.low.u32 %v603
  %v605 = vextract.high.u32 %v603
  %v606 = vmul.u32 %v599, %v590
  %v607 = vadd.s32 %v602, %v604
  %vm608 = vc.u32 %v602, %v604
  %v609 = vadd.s32 %v605, 1
  %v610 = vsel %vm608, %v609, %v605
  %v611 = vadd.s32 %v606, %v610
  %v612 = vadd.s32 %v611, 536870912
  %v613 = vshrl.u32 %v612, 30
  %v614 = vshll.u32 %v613, 30
  %v615 = vsub.s32 %v611, %v614
  %vm616 = vcmp.lt.s32.totalorder %v615, 0
  %v617 = vsub.s32 0, %v615
  %v618 = vsel %vm616, %v617, %v615
  %v619 = vclz %v618
  %v620 = vsub.s32 %v619, 2
  %vm621 = vcmp.gt.s32.totalorder 0, %v620
  %v622 = vsel %vm621, 0, %v620
  %v623 = vsub.s32 32, %v622
  %v624 = vshll.u32 %v615, %v622
  %v625 = vshrl.u32 %v607, %v623
  %v626 = vor.u32 %v624, %v625
  %v627 = vsub.s32 4294967266, %v622
  %v628 = vadd.s32 %v627, 127
  %v629 = vshll.u32 %v628, 23
  %v630 = vor.u32 4788187, %v629
  %v631 = vand.u32 2147483647, %v630
  %v633 = vcvt.s32.f32 %v626
  %v634 = vmul.f32 %v633, %v631
  %v635 = vxor.u32 %v634, 2147483648
  %v636 = vsel %vm553, %v635, %v634
  %v637 = vsub.s32 4, %v613
  %v638 = vsel %vm553, %v637, %v613
  %v639 = vsel %vm552, %v114, %v636
  %v640 = vsel %vm552, 0, %v638
  %v641 = vcosq.f32.pop %v639
  %v642 = vsinq.f32.pop %v639
  %vm643 = vweird.f32 %v114
  %v644 = vand.u32 %v640, 3
  %vm645 = vcmp.lt.s32.totalorder %v644, 2
  %vm646 = vcmp.eq.s32.totalorder %v644, 0
  %v647 = vxor.u32 %v642, 2147483648
  %v648 = vsel %vm646, %v641, %v647
  %vm649 = vcmp.eq.s32.totalorder %v644, 2
  %v650 = vxor.u32 %v641, 2147483648
  %v651 = vsel %vm649, %v650, %v642
  %v652 = vsel %vm645, %v648, %v651
  %v653 = vsel %vm643, nan, %v652
  %v654 = vand.u32 2147483647, %v115
  %vm655 = vcmp.le.f32.partialorder %v654, 0.7853982
  %vm656 = vcmp.lt.s32.totalorder %v115, 0
  %v657 = vand.u32 %v115, 2139095040
  %v658 = vshrl.u32 %v657, 23
  %v659 = vsub.s32 %v658, 127
  %v660 = vand.u32 2147483647, %v115
  %v661 = vand.u32 %v660, 8388607
  %v662 = vor.u32 %v661, 8388608
  %v663 = vsub.s32 0, %v662
  %v664 = vadd.s32 %v659, 1
  %vm665 = vcmp.gt.s32.totalorder %v664, 0
  %v666 = vsel %vm665, %v664, 0
  %v667 = vshrl.u32 %v666, 5
  %v668 = vand.u32 %v666, 31
  %v669 = vsub.s32 32, %v668
  %v670 = vshrl.u32 683565275, %v669
  %v671 = vshll.u32 683565275, %v668
  %v672 = vshrl.u32 2475754826, %v669
  %v673 = vor.u32 %v671, %v672
  %v674 = vshll.u32 2475754826, %v668
  %v675 = vshrl.u32 2131351028, %v669
  %v676 = vor.u32 %v674, %v675
  %v677 = vshll.u32 2131351028, %v668
  %v678 = vshrl.u32 2102212464, %v669
  %v679 = vor.u32 %v677, %v678
  %v680 = vshll.u32 2102212464, %v668
  %v681 = vshrl.u32 920167782, %v669
  %v682 = vor.u32 %v680, %v681
  %v683 = vshll.u32 920167782, %v668
  %v684 = vshrl.u32 1326507024, %v669
  %v685 = vor.u32 %v683, %v684
  %vm686 = vcmp.lt.s32.totalorder %v667, 1
  %vm687 = vcmp.lt.s32.totalorder %v667, 2
  %vm688 = vcmp.lt.s32.totalorder %v667, 3
  %vm689 = vcmp.lt.s32.totalorder %v667, 4
  %v690 = vsel %vm686, %v670, %v673
  %v691 = vsel %vm689, %v679, 2102212464
  %v692 = vsel %vm688, %v676, %v691
  %v693 = vsel %vm687, %v690, %v692
  %v694 = vsel %vm686, %v673, %v676
  %v695 = vsel %vm689, %v682, 920167782
  %v696 = vsel %vm688, %v679, %v695
  %v697 = vsel %vm687, %v694, %v696
  %v698 = vsel %vm686, %v676, %v679
  %v699 = vsel %vm689, %v685, 1326507024
  %v700 = vsel %vm688, %v682, %v699
  %v701 = vsel %vm687, %v698, %v700
  %v702 = vshll.u32 %v662, 8
  %v703 = vmul.u32.u64.compose %v702, %v701
  %v704 = vextract.low.u32 %v703
  %v705 = vextract.high.u32 %v703
  %v706 = vmul.u32.u64.compose %v702, %v697
  %v707 = vextract.low.u32 %v706
  %v708 = vextract.high.u32 %v706
  %v709 = vmul.u32 %v702, %v693
  %v710 = vadd.s32 %v705, %v707
  %vm711 = vc.u32 %v705, %v707
  %v712 = vadd.s32 %v708, 1
  %v713 = vsel %vm711, %v712, %v708
  %v714 = vadd.s32 %v709, %v713
  %v715 = vadd.s32 %v714, 536870912
  %v716 = vshrl.u32 %v715, 30
  %v717 = vshll.u32 %v716, 30
  %v718 = vsub.s32 %v714, %v717
  %vm719 = vcmp.lt.s32.totalorder %v718, 0
  %v720 = vsub.s32 0, %v718
  %v721 = vsel %vm719, %v720, %v718
  %v722 = vclz %v721
  %v723 = vsub.s32 %v722, 2
  %vm724 = vcmp.gt.s32.totalorder 0, %v723
  %v725 = vsel %vm724, 0, %v723
  %v726 = vsub.s32 32, %v725
  %v727 = vshll.u32 %v718, %v725
  %v728 = vshrl.u32 %v710, %v726
  %v729 = vor.u32 %v727, %v728
  %v730 = vsub.s32 4294967266, %v725
  %v731 = vadd.s32 %v730, 127
  %v732 = vshll.u32 %v731, 23
  %v733 = vor.u32 4788187, %v732
  %v734 = vand.u32 2147483647, %v733
  %v736 = vcvt.s32.f32 %v729
  %v737 = vmul.f32 %v736, %v734
  %v738 = vxor.u32 %v737, 2147483648
  %v739 = vsel %vm656, %v738, %v737
  %v740 = vsub.s32 4, %v716
  %v741 = vsel %vm656, %v740, %v716
  %v742 = vsel %vm655, %v115, %v739
  %v743 = vsel %vm655, 0, %v741
  %v744 = vcosq.f32.pop %v742
  %v745 = vsinq.f32.pop %v742
  %vm746 = vweird.f32 %v115
  %v747 = vand.u32 %v743, 3
  %vm748 = vcmp.lt.s32.totalorder %v747, 2
  %vm749 = vcmp.eq.s32.totalorder %v747, 0
  %v750 = vxor.u32 %v745, 2147483648
  %v751 = vsel %vm749, %v744, %v750
  %vm752 = vcmp.eq.s32.totalorder %v747, 2
  %v753 = vxor.u32 %v744, 2147483648
  %v754 = vsel %vm752, %v753, %v745
  %v755 = vsel %vm748, %v751, %v754
  %v756 = vsel %vm746, nan, %v755
  %v757 = vand.u32 2147483647, %v116
  %vm758 = vcmp.le.f32.partialorder %v757, 0.7853982
  %vm759 = vcmp.lt.s32.totalorder %v116, 0
  %v760 = vand.u32 %v116, 2139095040
  %v761 = vshrl.u32 %v760, 23
  %v762 = vsub.s32 %v761, 127
  %v763 = vand.u32 2147483647, %v116
  %v764 = vand.u32 %v763, 8388607
  %v765 = vor.u32 %v764, 8388608
  %v766 = vsub.s32 0, %v765
  %v767 = vadd.s32 %v762, 1
  %vm768 = vcmp.gt.s32.totalorder %v767, 0
  %v769 = vsel %vm768, %v767, 0
  %v770 = vshrl.u32 %v769, 5
  %v771 = vand.u32 %v769, 31
  %v772 = vsub.s32 32, %v771
  %v773 = vshrl.u32 683565275, %v772
  %v774 = vshll.u32 683565275, %v771
  %v775 = vshrl.u32 2475754826, %v772
  %v776 = vor.u32 %v774, %v775
  %v777 = vshll.u32 2475754826, %v771
  %v778 = vshrl.u32 2131351028, %v772
  %v779 = vor.u32 %v777, %v778
  %v780 = vshll.u32 2131351028, %v771
  %v781 = vshrl.u32 2102212464, %v772
  %v782 = vor.u32 %v780, %v781
  %v783 = vshll.u32 2102212464, %v771
  %v784 = vshrl.u32 920167782, %v772
  %v785 = vor.u32 %v783, %v784
  %v786 = vshll.u32 920167782, %v771
  %v787 = vshrl.u32 1326507024, %v772
  %v788 = vor.u32 %v786, %v787
  %vm789 = vcmp.lt.s32.totalorder %v770, 1
  %vm790 = vcmp.lt.s32.totalorder %v770, 2
  %vm791 = vcmp.lt.s32.totalorder %v770, 3
  %vm792 = vcmp.lt.s32.totalorder %v770, 4
  %v793 = vsel %vm789, %v773, %v776
  %v794 = vsel %vm792, %v782, 2102212464
  %v795 = vsel %vm791, %v779, %v794
  %v796 = vsel %vm790, %v793, %v795
  %v797 = vsel %vm789, %v776, %v779
  %v798 = vsel %vm792, %v785, 920167782
  %v799 = vsel %vm791, %v782, %v798
  %v800 = vsel %vm790, %v797, %v799
  %v801 = vsel %vm789, %v779, %v782
  %v802 = vsel %vm792, %v788, 1326507024
  %v803 = vsel %vm791, %v785, %v802
  %v804 = vsel %vm790, %v801, %v803
  %v805 = vshll.u32 %v765, 8
  %v806 = vmul.u32.u64.compose %v805, %v804
  %v807 = vextract.low.u32 %v806
  %v808 = vextract.high.u32 %v806
  %v809 = vmul.u32.u64.compose %v805, %v800
  %v810 = vextract.low.u32 %v809
  %v811 = vextract.high.u32 %v809
  %v812 = vmul.u32 %v805, %v796
  %v813 = vadd.s32 %v808, %v810
  %vm814 = vc.u32 %v808, %v810
  %v815 = vadd.s32 %v811, 1
  %v816 = vsel %vm814, %v815, %v811
  %v817 = vadd.s32 %v812, %v816
  %v818 = vadd.s32 %v817, 536870912
  %v819 = vshrl.u32 %v818, 30
  %v820 = vshll.u32 %v819, 30
  %v821 = vsub.s32 %v817, %v820
  %vm822 = vcmp.lt.s32.totalorder %v821, 0
  %v823 = vsub.s32 0, %v821
  %v824 = vsel %vm822, %v823, %v821
  %v825 = vclz %v824
  %v826 = vsub.s32 %v825, 2
  %vm827 = vcmp.gt.s32.totalorder 0, %v826
  %v828 = vsel %vm827, 0, %v826
  %v829 = vsub.s32 32, %v828
  %v830 = vshll.u32 %v821, %v828
  %v831 = vshrl.u32 %v813, %v829
  %v832 = vor.u32 %v830, %v831
  %v833 = vsub.s32 4294967266, %v828
  %v834 = vadd.s32 %v833, 127
  %v835 = vshll.u32 %v834, 23
  %v836 = vor.u32 4788187, %v835
  %v837 = vand.u32 2147483647, %v836
  %v839 = vcvt.s32.f32 %v832
  %v840 = vmul.f32 %v839, %v837
  %v841 = vxor.u32 %v840, 2147483648
  %v842 = vsel %vm759, %v841, %v840
  %v843 = vsub.s32 4, %v819
  %v844 = vsel %vm759, %v843, %v819
  %v845 = vsel %vm758, %v116, %v842
  %v846 = vsel %vm758, 0, %v844
  %v847 = vcosq.f32.pop %v845
  %v848 = vsinq.f32.pop %v845
  %vm849 = vweird.f32 %v116
  %v850 = vand.u32 %v846, 3
  %vm851 = vcmp.lt.s32.totalorder %v850, 2
  %vm852 = vcmp.eq.s32.totalorder %v850, 0
  %v853 = vxor.u32 %v848, 2147483648
  %v854 = vsel %vm852, %v847, %v853
  %vm855 = vcmp.eq.s32.totalorder %v850, 2
  %v856 = vxor.u32 %v847, 2147483648
  %v857 = vsel %vm855, %v856, %v848
  %v858 = vsel %vm851, %v854, %v857
  %v859 = vsel %vm849, nan, %v858
  %v860 = vand.u32 2147483647, %v117
  %vm861 = vcmp.le.f32.partialorder %v860, 0.7853982
  %vm862 = vcmp.lt.s32.totalorder %v117, 0
  %v863 = vand.u32 %v117, 2139095040
  %v864 = vshrl.u32 %v863, 23
  %v865 = vsub.s32 %v864, 127
  %v866 = vand.u32 2147483647, %v117
  %v867 = vand.u32 %v866, 8388607
  %v868 = vor.u32 %v867, 8388608
  %v869 = vsub.s32 0, %v868
  %v870 = vadd.s32 %v865, 1
  %vm871 = vcmp.gt.s32.totalorder %v870, 0
  %v872 = vsel %vm871, %v870, 0
  %v873 = vshrl.u32 %v872, 5
  %v874 = vand.u32 %v872, 31
  %v875 = vsub.s32 32, %v874
  %v876 = vshrl.u32 683565275, %v875
  %v877 = vshll.u32 683565275, %v874
  %v878 = vshrl.u32 2475754826, %v875
  %v879 = vor.u32 %v877, %v878
  %v880 = vshll.u32 2475754826, %v874
  %v881 = vshrl.u32 2131351028, %v875
  %v882 = vor.u32 %v880, %v881
  %v883 = vshll.u32 2131351028, %v874
  %v884 = vshrl.u32 2102212464, %v875
  %v885 = vor.u32 %v883, %v884
  %v886 = vshll.u32 2102212464, %v874
  %v887 = vshrl.u32 920167782, %v875
  %v888 = vor.u32 %v886, %v887
  %v889 = vshll.u32 920167782, %v874
  %v890 = vshrl.u32 1326507024, %v875
  %v891 = vor.u32 %v889, %v890
  %vm892 = vcmp.lt.s32.totalorder %v873, 1
  %vm893 = vcmp.lt.s32.totalorder %v873, 2
  %vm894 = vcmp.lt.s32.totalorder %v873, 3
  %vm895 = vcmp.lt.s32.totalorder %v873, 4
  %v896 = vsel %vm892, %v876, %v879
  %v897 = vsel %vm895, %v885, 2102212464
  %v898 = vsel %vm894, %v882, %v897
  %v899 = vsel %vm893, %v896, %v898
  %v900 = vsel %vm892, %v879, %v882
  %v901 = vsel %vm895, %v888, 920167782
  %v902 = vsel %vm894, %v885, %v901
  %v903 = vsel %vm893, %v900, %v902
  %v904 = vsel %vm892, %v882, %v885
  %v905 = vsel %vm895, %v891, 1326507024
  %v906 = vsel %vm894, %v888, %v905
  %v907 = vsel %vm893, %v904, %v906
  %v908 = vshll.u32 %v868, 8
  %v909 = vmul.u32.u64.compose %v908, %v907
  %v910 = vextract.low.u32 %v909
  %v911 = vextract.high.u32 %v909
  %v912 = vmul.u32.u64.compose %v908, %v903
  %v913 = vextract.low.u32 %v912
  %v914 = vextract.high.u32 %v912
  %v915 = vmul.u32 %v908, %v899
  %v916 = vadd.s32 %v911, %v913
  %vm917 = vc.u32 %v911, %v913
  %v918 = vadd.s32 %v914, 1
  %v919 = vsel %vm917, %v918, %v914
  %v920 = vadd.s32 %v915, %v919
  %v921 = vadd.s32 %v920, 536870912
  %v922 = vshrl.u32 %v921, 30
  %v923 = vshll.u32 %v922, 30
  %v924 = vsub.s32 %v920, %v923
  %vm925 = vcmp.lt.s32.totalorder %v924, 0
  %v926 = vsub.s32 0, %v924
  %v927 = vsel %vm925, %v926, %v924
  %v928 = vclz %v927
  %v929 = vsub.s32 %v928, 2
  %vm930 = vcmp.gt.s32.totalorder 0, %v929
  %v931 = vsel %vm930, 0, %v929
  %v932 = vsub.s32 32, %v931
  %v933 = vshll.u32 %v924, %v931
  %v934 = vshrl.u32 %v916, %v932
  %v935 = vor.u32 %v933, %v934
  %v936 = vsub.s32 4294967266, %v931
  %v937 = vadd.s32 %v936, 127
  %v938 = vshll.u32 %v937, 23
  %v939 = vor.u32 4788187, %v938
  %v940 = vand.u32 2147483647, %v939
  %v942 = vcvt.s32.f32 %v935
  %v943 = vmul.f32 %v942, %v940
  %v944 = vxor.u32 %v943, 2147483648
  %v945 = vsel %vm862, %v944, %v943
  %v946 = vsub.s32 4, %v922
  %v947 = vsel %vm862, %v946, %v922
  %v948 = vsel %vm861, %v117, %v945
  %v949 = vsel %vm861, 0, %v947
  %v950 = vcosq.f32.pop %v948
  %v951 = vsinq.f32.pop %v948
  %vm952 = vweird.f32 %v117
  %v953 = vand.u32 %v949, 3
  %vm954 = vcmp.lt.s32.totalorder %v953, 2
  %vm955 = vcmp.eq.s32.totalorder %v953, 0
  %v956 = vxor.u32 %v951, 2147483648
  %v957 = vsel %vm955, %v950, %v956
  %vm958 = vcmp.eq.s32.totalorder %v953, 2
  %v959 = vxor.u32 %v950, 2147483648
  %v960 = vsel %vm958, %v959, %v951
  %v961 = vsel %vm954, %v957, %v960
  %v962 = vsel %vm952, nan, %v961
  %v963 = vsel %vm547, %v653, 0.0
  %v964 = vsel %vm548, %v756, 0.0
  %v965 = vsel %vm549, %v859, 0.0
  %v966 = vsel %vm550, %v962, 0.0
  %v967 = vsel %vm127, %v234, %v963
  %v968 = vsel %vm128, %v338, %v964
  %v969 = vsel %vm129, %v442, %v965
  %v970 = vsel %vm130, %v546, %v966
  %v971 = vsel %vm123, %v114, %v967
  %v972 = vsel %vm124, %v115, %v968
  %v973 = vsel %vm125, %v116, %v969
  %v974 = vsel %vm126, %v117, %v970
  %v975 = vld [vmem:[%s2] sm:$0xff]
  %v976 = vld [vmem:[%s2 + $0x8] sm:$0xff]
  %v977 = vld [vmem:[%s2 + $0x10] sm:$0xff]
  %v978 = vld [vmem:[%s2 + $0x18] sm:$0xff]
  %v979 = vld [vmem:[%s2 + $0x20] sm:$0xff]
  %v980 = vld [vmem:[%s2 + $0x28] sm:$0xff]
  %v981 = vld [vmem:[%s2 + $0x30] sm:$0xff]
  %v982 = vld [vmem:[%s2 + $0x38] sm:$0xff]
  %v983 = vld [vmem:[%s3] sm:$0xff]
  %v984 = vld [vmem:[%s3 + $0x8] sm:$0xff]
  %v985 = vld [vmem:[%s3 + $0x10] sm:$0xff]
  %v986 = vld [vmem:[%s3 + $0x18] sm:$0xff]
  %v987 = vld [vmem:[%s3 + $0x20] sm:$0xff]
  %v988 = vld [vmem:[%s3 + $0x28] sm:$0xff]
  %v989 = vld [vmem:[%s3 + $0x30] sm:$0xff]
  %v990 = vld [vmem:[%s3 + $0x38] sm:$0xff]
  %992 = vset.pattern.permute.xlu0 0
  %993 = vperm.xlu0 %992, %v983
  %v994 = vpop.permute.xlu0 %993
  %997 = vset.pattern.permute.xlu0 0
  %998 = vperm.xlu0 %997, %v984
  %v999 = vpop.permute.xlu0 %998
  %1002 = vset.pattern.permute.xlu0 0
  %1003 = vperm.xlu0 %1002, %v985
  %v1004 = vpop.permute.xlu0 %1003
  %1007 = vset.pattern.permute.xlu0 0
  %1008 = vperm.xlu0 %1007, %v986
  %v1009 = vpop.permute.xlu0 %1008
  %1012 = vset.pattern.permute.xlu0 0
  %1013 = vperm.xlu0 %1012, %v987
  %v1014 = vpop.permute.xlu0 %1013
  %1017 = vset.pattern.permute.xlu0 0
  %1018 = vperm.xlu0 %1017, %v988
  %v1019 = vpop.permute.xlu0 %1018
  %1022 = vset.pattern.permute.xlu0 0
  %1023 = vperm.xlu0 %1022, %v989
  %v1024 = vpop.permute.xlu0 %1023
  %1027 = vset.pattern.permute.xlu0 0
  %1028 = vperm.xlu0 %1027, %v990
  %v1029 = vpop.permute.xlu0 %1028
  %vm1031 = vcmask 261120
  %v1033 = vsel %vm1031, %v975, 0
  %v1036 = vsel %vm1031, %v976, 0
  %v1039 = vsel %vm1031, %v977, 0
  %v1042 = vsel %vm1031, %v978, 0
  %v1045 = vsel %vm1031, %v979, 0
  %v1048 = vsel %vm1031, %v980, 0
  %v1051 = vsel %vm1031, %v981, 0
  %v1054 = vsel %vm1031, %v982, 0
  %1056 = vmatprep.subr.mxu0 0.0
  %1057 = vmatpush1.msra.mxu0 0.0
  %1058 = vmatprep.subr.mxu0 0.0
  %1059 = vmatpush1.msra.mxu0 0.0
  %1060 = vmatprep.subr.mxu0 0.0
  %1061 = vmatpush1.msra.mxu0 0.0
  %1062 = vmatprep.subr.mxu0 0.0
  %1063 = vmatpush1.msra.mxu0 0.0
  %1064 = vmatprep.subr.mxu0 0.0
  %1065 = vmatpush1.msra.mxu0 0.0
  %1066 = vmatprep.subr.mxu0 0.0
  %1067 = vmatpush1.msra.mxu0 0.0
  %1068 = vmatprep.subr.mxu0 0.0
  %1069 = vmatpush1.msra.mxu0 0.0
  %1070 = vmatprep.subr.mxu0 0.0
  %1071 = vmatpush1.msra.mxu0 0.0
  %1072 = vmatprep.subr.mxu0 0.0
  %1073 = vmatpush1.msra.mxu0 0.0
  %1074 = vmatprep.subr.mxu0 0.0
  %1075 = vmatpush1.msra.mxu0 0.0
  %1076 = vmatprep.subr.mxu0 0.0
  %1077 = vmatpush1.msra.mxu0 0.0
  %1078 = vmatprep.subr.mxu0 0.0
  %1079 = vmatpush1.msra.mxu0 0.0
  %1080 = vmatprep.subr.mxu0 0.0
  %1081 = vmatpush1.msra.mxu0 %v974
  %1082 = vmatprep.subr.mxu0 0.0
  %1083 = vmatpush1.msra.mxu0 %v973
  %1084 = vmatprep.subr.mxu0 0.0
  %1085 = vmatpush1.msra.mxu0 %v972
  %1086 = vmatprep.subr.mxu0 0.0
  %1087 = vmatpush1.msra.mxu0 %v971
  %1088 = vmatprep.subr.mxu0 0.0
  %1089 = vmatpush2.msra.mxu0 0.0
  %1090 = vmatprep.subr.mxu0 0.0
  %1091 = vmatpush2.msra.mxu0 0.0
  %1092 = vmatprep.subr.mxu0 0.0
  %1093 = vmatpush2.msra.mxu0 0.0
  %1094 = vmatprep.subr.mxu0 0.0
  %1095 = vmatpush2.msra.mxu0 0.0
  %1096 = vmatprep.subr.mxu0 0.0
  %1097 = vmatpush2.msra.mxu0 0.0
  %1098 = vmatprep.subr.mxu0 0.0
  %1099 = vmatpush2.msra.mxu0 0.0
  %1100 = vmatprep.subr.mxu0 0.0
  %1101 = vmatpush2.msra.mxu0 0.0
  %1102 = vmatprep.subr.mxu0 0.0
  %1103 = vmatpush2.msra.mxu0 0.0
  %1104 = vmatprep.subr.mxu0 0.0
  %1105 = vmatpush2.msra.mxu0 0.0
  %1106 = vmatprep.subr.mxu0 0.0
  %1107 = vmatpush2.msra.mxu0 0.0
  %1108 = vmatprep.subr.mxu0 0.0
  %1109 = vmatpush2.msra.mxu0 0.0
  %1110 = vmatprep.subr.mxu0 0.0
  %1111 = vmatpush2.msra.mxu0 0.0
  %1112 = vmatprep.subr.mxu0 0.0
  %1113 = vmatpush2.msra.mxu0 0.0
  %1114 = vmatprep.subr.mxu0 0.0
  %1115 = vmatpush2.msra.mxu0 0.0
  %1116 = vmatprep.subr.mxu0 0.0
  %1117 = vmatpush2.msra.mxu0 0.0
  %1118 = vmatprep.subr.mxu0 0.0
  %1119 = vmatpush2.msra.mxu0 0.0
  %1120 = vmatprep.mubr.f32.mxu0 0.0
  %1121 = vmatmul.mubr.f32.gmra.mxu0 %v1033
  %v1122 = vpop.f32.mrf.mxu0
  %v1123 = vadd.f32 %v994, %v1122
  %v1124 = vpop.f32.mrf.mxu0
  %1125 = vmatprep.mubr.f32.mxu0 0.0
  %1126 = vmatmul.mubr.f32.gmra.mxu0 %v1036
  %v1127 = vpop.f32.mrf.mxu0
  %v1128 = vadd.f32 %v999, %v1127
  %v1129 = vpop.f32.mrf.mxu0
  %1130 = vmatprep.mubr.f32.mxu0 0.0
  %1131 = vmatmul.mubr.f32.gmra.mxu0 %v1039
  %v1132 = vpop.f32.mrf.mxu0
  %v1133 = vadd.f32 %v1004, %v1132
  %v1134 = vpop.f32.mrf.mxu0
  %1135 = vmatprep.mubr.f32.mxu0 0.0
  %1136 = vmatmul.mubr.f32.gmra.mxu0 %v1042
  %v1137 = vpop.f32.mrf.mxu0
  %v1138 = vadd.f32 %v1009, %v1137
  %v1139 = vpop.f32.mrf.mxu0
  %1140 = vmatprep.mubr.f32.mxu0 0.0
  %1141 = vmatmul.mubr.f32.gmra.mxu0 %v1045
  %v1142 = vpop.f32.mrf.mxu0
  %v1143 = vadd.f32 %v1014, %v1142
  %v1144 = vpop.f32.mrf.mxu0
  %1145 = vmatprep.mubr.f32.mxu0 0.0
  %1146 = vmatmul.mubr.f32.gmra.mxu0 %v1048
  %v1147 = vpop.f32.mrf.mxu0
  %v1148 = vadd.f32 %v1019, %v1147
  %v1149 = vpop.f32.mrf.mxu0
  %1150 = vmatprep.mubr.f32.mxu0 0.0
  %1151 = vmatmul.mubr.f32.gmra.mxu0 %v1051
  %v1152 = vpop.f32.mrf.mxu0
  %v1153 = vadd.f32 %v1024, %v1152
  %v1154 = vpop.f32.mrf.mxu0
  %1155 = vmatprep.mubr.f32.mxu0 0.0
  %1156 = vmatmul.mubr.f32.gmra.mxu0 %v1054
  %v1157 = vpop.f32.mrf.mxu0
  %v1158 = vadd.f32 %v1029, %v1157
  %v1159 = vpop.f32.mrf.mxu0
  %1160 = vdwg.mxu0
  %v1161 = vmax.f32 %v1123, 0.0
  %v1162 = vmax.f32 %v1128, 0.0
  %v1163 = vmax.f32 %v1133, 0.0
  %v1164 = vmax.f32 %v1138, 0.0
  %v1165 = vmax.f32 %v1143, 0.0
  %v1166 = vmax.f32 %v1148, 0.0
  %v1167 = vmax.f32 %v1153, 0.0
  %v1168 = vmax.f32 %v1158, 0.0
  %v1169 = vld [vmem:[%s4] sm:$0xff]
  %v1170 = vld [vmem:[%s4 + $0x8] sm:$0xff]
  %v1171 = vld [vmem:[%s4 + $0x10] sm:$0xff]
  %v1172 = vld [vmem:[%s4 + $0x18] sm:$0xff]
  %v1173 = vld [vmem:[%s4 + $0x20] sm:$0xff]
  %v1174 = vld [vmem:[%s4 + $0x28] sm:$0xff]
  %v1175 = vld [vmem:[%s4 + $0x30] sm:$0xff]
  %v1176 = vld [vmem:[%s4 + $0x38] sm:$0xff]
  %v1177 = vld [vmem:[%s5] sm:$0xff]
  %v1178 = vld [vmem:[%s5 + $0x8] sm:$0xff]
  %v1179 = vld [vmem:[%s5 + $0x10] sm:$0xff]
  %v1180 = vld [vmem:[%s5 + $0x18] sm:$0xff]
  %v1181 = vld [vmem:[%s5 + $0x20] sm:$0xff]
  %v1182 = vld [vmem:[%s5 + $0x28] sm:$0xff]
  %v1183 = vld [vmem:[%s5 + $0x30] sm:$0xff]
  %v1184 = vld [vmem:[%s5 + $0x38] sm:$0xff]
  %1186 = vset.pattern.permute.xlu0 0
  %1187 = vperm.xlu0 %1186, %v1177
  %v1188 = vpop.permute.xlu0 %1187
  %1191 = vset.pattern.permute.xlu0 0
  %1192 = vperm.xlu0 %1191, %v1178
  %v1193 = vpop.permute.xlu0 %1192
  %1196 = vset.pattern.permute.xlu0 0
  %1197 = vperm.xlu0 %1196, %v1179
  %v1198 = vpop.permute.xlu0 %1197
  %1201 = vset.pattern.permute.xlu0 0
  %1202 = vperm.xlu0 %1201, %v1180
  %v1203 = vpop.permute.xlu0 %1202
  %1206 = vset.pattern.permute.xlu0 0
  %1207 = vperm.xlu0 %1206, %v1181
  %v1208 = vpop.permute.xlu0 %1207
  %1211 = vset.pattern.permute.xlu0 0
  %1212 = vperm.xlu0 %1211, %v1182
  %v1213 = vpop.permute.xlu0 %1212
  %1216 = vset.pattern.permute.xlu0 0
  %1217 = vperm.xlu0 %1216, %v1183
  %v1218 = vpop.permute.xlu0 %1217
  %1221 = vset.pattern.permute.xlu0 0
  %1222 = vperm.xlu0 %1221, %v1184
  %v1223 = vpop.permute.xlu0 %1222
  %vm1225 = vcmask 523264
  %v1227 = vsel %vm1225, %v1169, 0
  %v1230 = vsel %vm1225, %v1170, 0
  %v1233 = vsel %vm1225, %v1171, 0
  %v1236 = vsel %vm1225, %v1172, 0
  %v1239 = vsel %vm1225, %v1173, 0
  %v1242 = vsel %vm1225, %v1174, 0
  %v1245 = vsel %vm1225, %v1175, 0
  %v1248 = vsel %vm1225, %v1176, 0
  %1250 = vmatprep.subr.mxu0 0.0
  %1251 = vmatpush1.msra.mxu0 0.0
  %1252 = vmatprep.subr.mxu0 0.0
  %1253 = vmatpush1.msra.mxu0 0.0
  %1254 = vmatprep.subr.mxu0 0.0
  %1255 = vmatpush1.msra.mxu0 0.0
  %1256 = vmatprep.subr.mxu0 0.0
  %1257 = vmatpush1.msra.mxu0 0.0
  %1258 = vmatprep.subr.mxu0 0.0
  %1259 = vmatpush1.msra.mxu0 0.0
  %1260 = vmatprep.subr.mxu0 0.0
  %1261 = vmatpush1.msra.mxu0 0.0
  %1262 = vmatprep.subr.mxu0 0.0
  %1263 = vmatpush1.msra.mxu0 0.0
  %1264 = vmatprep.subr.mxu0 0.0
  %1265 = vmatpush1.msra.mxu0 0.0
  %1266 = vmatprep.subr.mxu0 0.0
  %1267 = vmatpush1.msra.mxu0 %v1168
  %1268 = vmatprep.subr.mxu0 0.0
  %1269 = vmatpush1.msra.mxu0 %v1167
  %1270 = vmatprep.subr.mxu0 0.0
  %1271 = vmatpush1.msra.mxu0 %v1166
  %1272 = vmatprep.subr.mxu0 0.0
  %1273 = vmatpush1.msra.mxu0 %v1165
  %1274 = vmatprep.subr.mxu0 0.0
  %1275 = vmatpush1.msra.mxu0 %v1164
  %1276 = vmatprep.subr.mxu0 0.0
  %1277 = vmatpush1.msra.mxu0 %v1163
  %1278 = vmatprep.subr.mxu0 0.0
  %1279 = vmatpush1.msra.mxu0 %v1162
  %1280 = vmatprep.subr.mxu0 0.0
  %1281 = vmatpush1.msra.mxu0 %v1161
  %1282 = vmatprep.subr.mxu0 0.0
  %1283 = vmatpush2.msra.mxu0 0.0
  %1284 = vmatprep.subr.mxu0 0.0
  %1285 = vmatpush2.msra.mxu0 0.0
  %1286 = vmatprep.subr.mxu0 0.0
  %1287 = vmatpush2.msra.mxu0 0.0
  %1288 = vmatprep.subr.mxu0 0.0
  %1289 = vmatpush2.msra.mxu0 0.0
  %1290 = vmatprep.subr.mxu0 0.0
  %1291 = vmatpush2.msra.mxu0 0.0
  %1292 = vmatprep.subr.mxu0 0.0
  %1293 = vmatpush2.msra.mxu0 0.0
  %1294 = vmatprep.subr.mxu0 0.0
  %1295 = vmatpush2.msra.mxu0 0.0
  %1296 = vmatprep.subr.mxu0 0.0
  %1297 = vmatpush2.msra.mxu0 0.0
  %1298 = vmatprep.subr.mxu0 0.0
  %1299 = vmatpush2.msra.mxu0 0.0
  %1300 = vmatprep.subr.mxu0 0.0
  %1301 = vmatpush2.msra.mxu0 0.0
  %1302 = vmatprep.subr.mxu0 0.0
  %1303 = vmatpush2.msra.mxu0 0.0
  %1304 = vmatprep.subr.mxu0 0.0
  %1305 = vmatpush2.msra.mxu0 0.0
  %1306 = vmatprep.subr.mxu0 0.0
  %1307 = vmatpush2.msra.mxu0 0.0
  %1308 = vmatprep.subr.mxu0 0.0
  %1309 = vmatpush2.msra.mxu0 0.0
  %1310 = vmatprep.subr.mxu0 0.0
  %1311 = vmatpush2.msra.mxu0 0.0
  %1312 = vmatprep.subr.mxu0 0.0
  %1313 = vmatpush2.msra.mxu0 0.0
  %1314 = vmatprep.mubr.f32.mxu0 0.0
  %1315 = vmatmul.mubr.f32.gmra.mxu0 %v1227
  %v1316 = vpop.f32.mrf.mxu0
  %v1317 = vadd.f32 %v1188, %v1316
  %v1318 = vpop.f32.mrf.mxu0
  %1319 = vmatprep.mubr.f32.mxu0 0.0
  %1320 = vmatmul.mubr.f32.gmra.mxu0 %v1230
  %v1321 = vpop.f32.mrf.mxu0
  %v1322 = vadd.f32 %v1193, %v1321
  %v1323 = vpop.f32.mrf.mxu0
  %1324 = vmatprep.mubr.f32.mxu0 0.0
  %1325 = vmatmul.mubr.f32.gmra.mxu0 %v1233
  %v1326 = vpop.f32.mrf.mxu0
  %v1327 = vadd.f32 %v1198, %v1326
  %v1328 = vpop.f32.mrf.mxu0
  %1329 = vmatprep.mubr.f32.mxu0 0.0
  %1330 = vmatmul.mubr.f32.gmra.mxu0 %v1236
  %v1331 = vpop.f32.mrf.mxu0
  %v1332 = vadd.f32 %v1203, %v1331
  %v1333 = vpop.f32.mrf.mxu0
  %1334 = vmatprep.mubr.f32.mxu0 0.0
  %1335 = vmatmul.mubr.f32.gmra.mxu0 %v1239
  %v1336 = vpop.f32.mrf.mxu0
  %v1337 = vadd.f32 %v1208, %v1336
  %v1338 = vpop.f32.mrf.mxu0
  %1339 = vmatprep.mubr.f32.mxu0 0.0
  %1340 = vmatmul.mubr.f32.gmra.mxu0 %v1242
  %v1341 = vpop.f32.mrf.mxu0
  %v1342 = vadd.f32 %v1213, %v1341
  %v1343 = vpop.f32.mrf.mxu0
  %1344 = vmatprep.mubr.f32.mxu0 0.0
  %1345 = vmatmul.mubr.f32.gmra.mxu0 %v1245
  %v1346 = vpop.f32.mrf.mxu0
  %v1347 = vadd.f32 %v1218, %v1346
  %v1348 = vpop.f32.mrf.mxu0
  %1349 = vmatprep.mubr.f32.mxu0 0.0
  %1350 = vmatmul.mubr.f32.gmra.mxu0 %v1248
  %v1351 = vpop.f32.mrf.mxu0
  %v1352 = vadd.f32 %v1223, %v1351
  %v1353 = vpop.f32.mrf.mxu0
  %1354 = vdwg.mxu0
  %v1355 = vmax.f32 %v1317, 0.0
  %v1356 = vmax.f32 %v1322, 0.0
  %v1357 = vmax.f32 %v1327, 0.0
  %v1358 = vmax.f32 %v1332, 0.0
  %v1359 = vmax.f32 %v1337, 0.0
  %v1360 = vmax.f32 %v1342, 0.0
  %v1361 = vmax.f32 %v1347, 0.0
  %v1362 = vmax.f32 %v1352, 0.0
  %v1363 = vld [vmem:[%s6] sm:$0xff]
  %v1364 = vld [vmem:[%s7] sm:$0xff]
  %1366 = vset.pattern.permute.xlu0 0
  %1367 = vperm.xlu0 %1366, %v1364
  %v1368 = vpop.permute.xlu0 %1367
  %v1371 = vsel %vm1225, %v1363, 0
  %1373 = vmatprep.subr.mxu0 0.0
  %1374 = vmatpush1.msra.mxu0 0.0
  %1375 = vmatprep.subr.mxu0 0.0
  %1376 = vmatpush1.msra.mxu0 0.0
  %1377 = vmatprep.subr.mxu0 0.0
  %1378 = vmatpush1.msra.mxu0 0.0
  %1379 = vmatprep.subr.mxu0 0.0
  %1380 = vmatpush1.msra.mxu0 0.0
  %1381 = vmatprep.subr.mxu0 0.0
  %1382 = vmatpush1.msra.mxu0 0.0
  %1383 = vmatprep.subr.mxu0 0.0
  %1384 = vmatpush1.msra.mxu0 0.0
  %1385 = vmatprep.subr.mxu0 0.0
  %1386 = vmatpush1.msra.mxu0 0.0
  %1387 = vmatprep.subr.mxu0 0.0
  %1388 = vmatpush1.msra.mxu0 0.0
  %1389 = vmatprep.subr.mxu0 0.0
  %1390 = vmatpush1.msra.mxu0 %v1362
  %1391 = vmatprep.subr.mxu0 0.0
  %1392 = vmatpush1.msra.mxu0 %v1361
  %1393 = vmatprep.subr.mxu0 0.0
  %1394 = vmatpush1.msra.mxu0 %v1360
  %1395 = vmatprep.subr.mxu0 0.0
  %1396 = vmatpush1.msra.mxu0 %v1359
  %1397 = vmatprep.subr.mxu0 0.0
  %1398 = vmatpush1.msra.mxu0 %v1358
  %1399 = vmatprep.subr.mxu0 0.0
  %1400 = vmatpush1.msra.mxu0 %v1357
  %1401 = vmatprep.subr.mxu0 0.0
  %1402 = vmatpush1.msra.mxu0 %v1356
  %1403 = vmatprep.subr.mxu0 0.0
  %1404 = vmatpush1.msra.mxu0 %v1355
  %1405 = vmatprep.subr.mxu0 0.0
  %1406 = vmatpush2.msra.mxu0 0.0
  %1407 = vmatprep.subr.mxu0 0.0
  %1408 = vmatpush2.msra.mxu0 0.0
  %1409 = vmatprep.subr.mxu0 0.0
  %1410 = vmatpush2.msra.mxu0 0.0
  %1411 = vmatprep.subr.mxu0 0.0
  %1412 = vmatpush2.msra.mxu0 0.0
  %1413 = vmatprep.subr.mxu0 0.0
  %1414 = vmatpush2.msra.mxu0 0.0
  %1415 = vmatprep.subr.mxu0 0.0
  %1416 = vmatpush2.msra.mxu0 0.0
  %1417 = vmatprep.subr.mxu0 0.0
  %1418 = vmatpush2.msra.mxu0 0.0
  %1419 = vmatprep.subr.mxu0 0.0
  %1420 = vmatpush2.msra.mxu0 0.0
  %1421 = vmatprep.subr.mxu0 0.0
  %1422 = vmatpush2.msra.mxu0 0.0
  %1423 = vmatprep.subr.mxu0 0.0
  %1424 = vmatpush2.msra.mxu0 0.0
  %1425 = vmatprep.subr.mxu0 0.0
  %1426 = vmatpush2.msra.mxu0 0.0
  %1427 = vmatprep.subr.mxu0 0.0
  %1428 = vmatpush2.msra.mxu0 0.0
  %1429 = vmatprep.subr.mxu0 0.0
  %1430 = vmatpush2.msra.mxu0 0.0
  %1431 = vmatprep.subr.mxu0 0.0
  %1432 = vmatpush2.msra.mxu0 0.0
  %1433 = vmatprep.subr.mxu0 0.0
  %1434 = vmatpush2.msra.mxu0 0.0
  %1435 = vmatprep.subr.mxu0 0.0
  %1436 = vmatpush2.msra.mxu0 0.0
  %1437 = vmatprep.mubr.f32.mxu0 0.0
  %1438 = vmatmul.mubr.f32.gmra.mxu0 %v1371
  %v1439 = vpop.f32.mrf.mxu0
  %v1440 = vadd.f32 %v1368, %v1439
  %v1441 = vpop.f32.mrf.mxu0
  %1442 = vdwg.mxu0
  %vm1443 = vcmp.eq.s32.totalorder %v119, 0
  %v1444 = vmax.f32 %v1440, 0.0
  %vm1445 = vcmp.ne.f32.partialorder %v1440, %v1440
  %v1446 = vadd.f32 %v1440, 0.0
  %v1447 = vand.u32 2147483647, %v1440
  %v1448 = vsub.f32 0.0, %v1447
  %v1449 = vmul.f32 %v1448, 1.442695
  %v1450 = vpow.pop %v1449
  %v1451 = vadd.f32 %v1450, 1.0
  %v1452 = vlog2.pop %v1451
  %v1453 = vmul.f32 %v1452, 0.6931472
  %v1454 = vmul.f32 -0.5, %v1450
  %v1455 = vadd.f32 %v1454, 1.0
  %v1456 = vmul.f32 %v1455, %v1450
  %v1457 = vand.u32 2147483647, %v1450
  %vm1458 = vcmp.lt.f32.partialorder %v1457, 0.0004427343
  %v1459 = vsel %vm1458, %v1456, %v1453
  %v1460 = vadd.f32 %v1444, %v1459
  %v1461 = vsel %vm1445, %v1446, %v1460
  %vm1462 = vcmp.lt.s32.totalorder %v119, 4
  %v1463 = vxor.u32 %v1440, 2147483648
  %v1464 = vmul.f32 %v1463, 1.442695
  %v1465 = vpow.pop %v1464
  %v1466 = vadd.f32 %v1465, 1.0
  %v1467 = vrcp.pop %v1466
  %v1468 = vmul.f32 1.0, %v1467
  %v1469 = vsel %vm1462, %v1468, 0.0
  %v1470 = vsel %vm1443, %v1461, %v1469
  %1471 = vst [vmem:[%s8] sm:$0xff] %v1470
  // Predicated region
  $region34: #{neraf_vision_field_value.1} parent=0 // pred_check
    _
  $region35: #{neraf_vision_field_value.1} parent=0 // pred_check_branch
    %1473 = sbr.rel (0) target = $region37
  $region36: #{neraf_vision_field_value.1} parent=0 // pred_region
    _
  $region37: #{neraf_vision_field_value.1} parent=0 // pred_fallthru
    _
  // Predicated region
  $region38: #{neraf_vision_field_value.1} parent=0 // pred_check
    _
  $region39: #{neraf_vision_field_value.1} parent=0 // pred_check_branch
    %1475 = sbr.rel (0) target = $region41
  $region40: #{neraf_vision_field_value.1} parent=0 // pred_region
    _
  $region41: #{neraf_vision_field_value.1} parent=0 // pred_fallthru
    _

</llo_original>
